<compile_context>
chip_gen: v5e
topology: v5e:2x2
jax: 0.10.0
libtpu: 0.0.40
codegen_flags: <defaults>
</compile_context>

<pallas_src>
import functools

import jax
import jax.numpy as jnp
from jax import lax
from jax.experimental import pallas as pl
from jax.experimental.pallas import tpu as pltpu

DP = 128          # lane-dense padded feature width (multiple of 128)
_EPS2 = 1e-24     # (F.normalize eps = 1e-12)^2, used under rsqrt


# --------------------------------------------------------------------------- #
# Parameter / feature packing (zero-pad every feature dim to DP lanes)          #
# --------------------------------------------------------------------------- #
def _pad_features(h):
    n, d = h.shape
    assert d <= DP
    return jnp.pad(h.astype(jnp.float32), ((0, 0), (0, DP - d)))


def _pack_params(params, residual):
    """Returns (layer_cfg, w_stack (L,2*DP,DP), b_stack (L,1,DP)) zero-padded."""
    layer_cfg, w_pads, b_pads = [], [], []
    n_layers = len(params)
    for idx, (w, b) in enumerate(params):
        d_in = w.shape[0] // 2
        d_out = w.shape[1]
        assert d_in <= DP and d_out <= DP
        wh = jnp.zeros((DP, DP), jnp.float32).at[:d_in, :d_out].set(
            w[:d_in].astype(jnp.float32))
        wc = jnp.zeros((DP, DP), jnp.float32).at[:d_in, :d_out].set(
            w[d_in:].astype(jnp.float32))
        w_pads.append(jnp.concatenate([wh, wc], axis=0))            # (2*DP, DP)
        b_pads.append(jnp.zeros((1, DP), jnp.float32).at[0, :d_out].set(
            b.astype(jnp.float32)))
        apply_relu = idx < n_layers - 1            # last layer: activation=None
        res = bool(residual) and (d_in == d_out)   # layer disables residual on dim mismatch
        layer_cfg.append((apply_relu, res))
    return tuple(layer_cfg), jnp.stack(w_pads), jnp.stack(b_pads)


# --------------------------------------------------------------------------- #
# Fused whole-net kernel: all layers in a single pallas_call (small graphs)     #
# --------------------------------------------------------------------------- #
def _fused_net_kernel(a_ref, h_ref, w_ref, b_ref, o_ref, *, layer_cfg):
    """a_ref: (N, N)  row-normalized adjacency (bf16 or f32)
       h_ref: (N, DP) f32 input features, zero-padded to DP lanes
       w_ref: (L, 2*DP, DP) f32 stacked [Wh; Wc] per layer (zero-padded)
       b_ref: (L, 1, DP)    f32 bias (zero-padded)
       o_ref: (N, DP) f32 output (real classes in the leading columns)
    """
    a = a_ref[...]
    h = h_ref[...]                                              # (N, DP) f32
    for l, (apply_relu, residual) in enumerate(layer_cfg):      # static unroll
        # mean aggregation over in-neighbors (MXU, f32 accumulation)
        c = jnp.dot(a, h.astype(a.dtype), preferred_element_type=jnp.float32)
        # Linear(concat([h, c])) as one fused matmul with K = 2*DP
        hc = jnp.concatenate([h, c], axis=-1)                   # (N, 2*DP) f32
        z = jnp.dot(hc, w_ref[l], preferred_element_type=jnp.float32) + b_ref[l]
        # F.normalize(p=2, dim=1): x / max(||x||, eps) == x * rsqrt(max(||x||^2, eps^2))
        ssq = jnp.sum(z * z, axis=-1, keepdims=True)
        z = z * lax.rsqrt(jnp.maximum(ssq, _EPS2))
        if apply_relu:
            z = jnp.maximum(z, 0.0)
        if residual:
            z = z + h
        h = z
    o_ref[...] = h.astype(o_ref.dtype)


def graphsage_net_fused(a_norm, h, params, *, residual=True,
                        agg_dtype=jnp.bfloat16):
    """Whole GraphSageNet in one kernel. Intended for graphs whose dense
    adjacency + padded features fit comfortably in VMEM."""
    N, _ = h.shape
    assert a_norm.shape == (N, N)
    assert N % 8 == 0, "pad the graph to a multiple of 8 nodes"
    n_layers = len(params)
    n_classes = params[-1][0].shape[1]

    layer_cfg, w_stack, b_stack = _pack_params(params, residual)
    h_p = _pad_features(h)
    a = a_norm.astype(agg_dtype)

    kernel = functools.partial(_fused_net_kernel, layer_cfg=layer_cfg)
    out = pl.pallas_call(
        kernel,
        out_shape=jax.ShapeDtypeStruct((N, DP), jnp.float32),
        grid_spec=pltpu.PrefetchScalarGridSpec(
            num_scalar_prefetch=0,
            grid=(1,),
            in_specs=[
                pl.BlockSpec((N, N), lambda i: (0, 0)),                   # adjacency
                pl.BlockSpec((N, DP), lambda i: (0, 0)),                  # features
                pl.BlockSpec((n_layers, 2 * DP, DP), lambda i: (0, 0, 0)),  # weights
                pl.BlockSpec((n_layers, 1, DP), lambda i: (0, 0, 0)),       # biases
            ],
            out_specs=pl.BlockSpec((N, DP), lambda i: (0, 0)),
        ),
        compiler_params=pltpu.CompilerParams(
            dimension_semantics=("arbitrary",),
            vmem_limit_bytes=48 * 1024 * 1024,   # keep under v7x's 64 MiB VMEM
        ),
    )(a, h_p, w_stack, b_stack)
    return out[:, :n_classes]


# --------------------------------------------------------------------------- #
# Scalable path: per-layer kernel with a K-tiled (source-node) reduction axis   #
# --------------------------------------------------------------------------- #
def _sage_layer_kernel(a_ref, hs_ref, hd_ref, w_ref, b_ref, o_ref, acc_ref,
                       *, apply_relu, residual):
    """One GraphSage layer for a (dst-tile, src-tile) grid step.
       a_ref  : (tile_n, tile_k) adjacency tile (bf16/f32)
       hs_ref : (tile_k, DP) source features (same dtype as a) for aggregation
       hd_ref : (tile_n, DP) destination features, f32
       w_ref  : (2*DP, DP)   fused [Wh; Wc] weight, f32
       b_ref  : (1, DP)      bias, f32
       o_ref  : (tile_n, DP) f32
       acc_ref: (tile_n, DP) f32 aggregation accumulator (persists over k)
    """
    k = pl.program_id(1)

    @pl.when(k == 0)
    def _():
        acc_ref[...] = jnp.zeros_like(acc_ref)

    acc_ref[...] += jnp.dot(a_ref[...], hs_ref[...],
                            preferred_element_type=jnp.float32)

    @pl.when(k == pl.num_programs(1) - 1)
    def _():
        h_dst = hd_ref[...]                                        # (tile_n, DP) f32
        hc = jnp.concatenate([h_dst, acc_ref[...]], axis=-1)       # (tile_n, 2*DP)
        z = jnp.dot(hc, w_ref[...], preferred_element_type=jnp.float32) + b_ref[...]
        ssq = jnp.sum(z * z, axis=-1, keepdims=True)
        z = z * lax.rsqrt(jnp.maximum(ssq, _EPS2))
        if apply_relu:
            z = jnp.maximum(z, 0.0)
        if residual:
            z = z + h_dst
        o_ref[...] = z.astype(o_ref.dtype)


def _graphsage_layer_tiled(a, h_p, w_p, b_p, *, apply_relu, residual,
                           tile_n, tile_k):
    N = h_p.shape[0]
    tile_n = min(tile_n, N)
    tile_k = min(tile_k, N)
    assert N % tile_n == 0 and N % tile_k == 0  # TODO(synk): pad ragged graphs (with guarded in-degree)
    h_src = h_p.astype(a.dtype)   # bf16 (or f32) operand for the aggregation matmul

    kernel = functools.partial(_sage_layer_kernel,
                               apply_relu=apply_relu, residual=residual)
    return pl.pallas_call(
        kernel,
        out_shape=jax.ShapeDtypeStruct((N, DP), jnp.float32),
        grid_spec=pltpu.PrefetchScalarGridSpec(
            num_scalar_prefetch=0,
            grid=(N // tile_n, N // tile_k),
            in_specs=[
                pl.BlockSpec((tile_n, tile_k), lambda i, k: (i, k)),  # adjacency tile
                pl.BlockSpec((tile_k, DP), lambda i, k: (k, 0)),      # src features
                pl.BlockSpec((tile_n, DP), lambda i, k: (i, 0)),      # dst features
                pl.BlockSpec((2 * DP, DP), lambda i, k: (0, 0)),      # fused weight
                pl.BlockSpec((1, DP), lambda i, k: (0, 0)),           # bias
            ],
            out_specs=pl.BlockSpec((tile_n, DP), lambda i, k: (i, 0)),
            scratch_shapes=[pltpu.VMEM((tile_n, DP), jnp.float32)],
        ),
        compiler_params=pltpu.CompilerParams(
            dimension_semantics=("parallel", "arbitrary"),
            vmem_limit_bytes=48 * 1024 * 1024,   # budget under v7x's 64 MiB VMEM
        ),
    )(a, h_src, h_p, w_p, b_p)


def graphsage_net_tiled(a_norm, h, params, *, residual=True,
                        agg_dtype=jnp.bfloat16, tile_n=256, tile_k=256):
    """Per-layer K-tiled path: adjacency streamed tile-by-tile; intermediates
    stay lane-dense (N, DP) between layers."""
    n_classes = params[-1][0].shape[1]
    layer_cfg, w_stack, b_stack = _pack_params(params, residual)
    a = a_norm.astype(agg_dtype)
    h_p = _pad_features(h)
    for idx, (apply_relu, res) in enumerate(layer_cfg):
        h_p = _graphsage_layer_tiled(a, h_p, w_stack[idx], b_stack[idx],
                                     apply_relu=apply_relu, residual=res,
                                     tile_n=tile_n, tile_k=tile_k)
    return h_p[:, :n_classes]


# --------------------------------------------------------------------------- #
# Reference, init, graph builder                                               #
# --------------------------------------------------------------------------- #
def graphsage_net_reference(a_norm, h, params, residual=True):
    """Pure-JAX f32 reference mirroring the torch forward pass."""
    n_layers = len(params)
    for idx, (w, b) in enumerate(params):
        d_in = w.shape[0] // 2
        d_out = w.shape[1]
        h_in = h
        c = a_norm @ h
        z = jnp.concatenate([h, c], axis=1) @ w + b
        norm = jnp.sqrt(jnp.sum(z * z, axis=1, keepdims=True))
        z = z / jnp.maximum(norm, 1e-12)
        if idx < n_layers - 1:
            z = jnp.maximum(z, 0.0)
        if residual and d_in == d_out:
            z = h_in + z
        h = z
    return h


def init_params(key, in_dim, hidden_dim, n_classes, n_layers):
    """Deterministic nn.Linear-style init for each layer's NodeApply.linear."""
    dims = ([(in_dim, hidden_dim)]
            + [(hidden_dim, hidden_dim)] * (n_layers - 1)
            + [(hidden_dim, n_classes)])
    params = []
    for d_in, d_out in dims:
        key, kw, kb = jax.random.split(key, 3)
        bound = 1.0 / jnp.sqrt(2.0 * d_in)  # fan_in = 2*d_in (concat)
        w = jax.random.uniform(kw, (2 * d_in, d_out), jnp.float32, -bound, bound)
        b = jax.random.uniform(kb, (d_out,), jnp.float32, -bound, bound)
        params.append((w, b))
    return params


def make_graph(key, n, p=0.05):
    """Random sparse directed graph + self-loops, row-normalized by in-degree
    (mean aggregator). In-degree is guarded so no row can divide by zero."""
    adj = (jax.random.uniform(key, (n, n)) < p).astype(jnp.float32)
    adj = jnp.maximum(adj, jnp.eye(n, dtype=jnp.float32))
    deg = jnp.sum(adj, axis=1, keepdims=True)
    return adj / jnp.maximum(deg, 1.0)


if __name__ == "__main__":
    # net_params: in_dim=16, hidden_dim=32, n_classes=8, L=2, residual=True,
    #             sage_aggregator='mean', batch_norm=False, builtin=False
    in_dim, hidden_dim, n_classes, L = 16, 32, 8, 2

    key = jax.random.PRNGKey(0)
    k_adj, k_h, k_p, k_adj2, k_h2 = jax.random.split(key, 5)

    params = init_params(k_p, in_dim, hidden_dim, n_classes, L)

    # --- small graph: fused whole-net kernel (one pallas_call for all layers) ---
    N = 128
    a_norm = make_graph(k_adj, N)
    h0 = jax.random.normal(k_h, (N, in_dim), dtype=jnp.float32)
    ref = graphsage_net_reference(a_norm, h0, params)

    out_exact = jax.block_until_ready(
        graphsage_net_fused(a_norm, h0, params, agg_dtype=jnp.float32))
    assert out_exact.shape == (N, n_classes), out_exact.shape
    err = float(jnp.max(jnp.abs(out_exact - ref)))
    assert err < 5e-3, f"fused (f32) mismatch vs reference: {err}"

    out_fast = jax.block_until_ready(
        graphsage_net_fused(a_norm, h0, params, agg_dtype=jnp.bfloat16))
    assert out_fast.shape == (N, n_classes), out_fast.shape
    assert bool(jnp.all(jnp.isfinite(out_fast)))

    # --- larger graph: per-layer K-tiled path (adjacency streamed in tiles) ---
    N2 = 256
    a2 = make_graph(k_adj2, N2)
    h2 = jax.random.normal(k_h2, (N2, in_dim), dtype=jnp.float32)
    ref2 = graphsage_net_reference(a2, h2, params)
    out2 = jax.block_until_ready(
        graphsage_net_tiled(a2, h2, params, agg_dtype=jnp.float32,
                            tile_n=128, tile_k=128))
    assert out2.shape == (N2, n_classes), out2.shape
    err2 = float(jnp.max(jnp.abs(out2 - ref2)))
    assert err2 < 5e-3, f"tiled (f32) mismatch vs reference: {err2}"

    print("KERNEL_OK")
</pallas_src>

<mosaic_0001>
module attributes {stable_mosaic.version = 11 : i64} {
  func.func @_fused_net_kernel(%arg0: i32, %arg1: memref<128x128xf32, #tpu.memory_space<vmem>>, %arg2: memref<128x128xf32, #tpu.memory_space<vmem>>, %arg3: memref<3x256x128xf32, #tpu.memory_space<vmem>>, %arg4: memref<3x1x128xf32, #tpu.memory_space<vmem>>, %arg5: memref<128x128xf32, #tpu.memory_space<vmem>>) attributes {dimension_semantics = [#tpu.dimension_semantics<arbitrary>], iteration_bounds = array<i64: 1>, scalar_prefetch = 0 : i64, scratch_operands = 0 : i64, tpu.core_type = #tpu.core_type<tc>, window_params = [{pipeline_mode = #tpu.pipeline_mode<synchronous>, transform_indices = @transform_0, window_bounds = array<i64: 128, 128>}, {pipeline_mode = #tpu.pipeline_mode<synchronous>, transform_indices = @transform_1, window_bounds = array<i64: 128, 128>}, {pipeline_mode = #tpu.pipeline_mode<synchronous>, transform_indices = @transform_2, window_bounds = array<i64: 3, 256, 128>}, {pipeline_mode = #tpu.pipeline_mode<synchronous>, transform_indices = @transform_3, window_bounds = array<i64: 3, 1, 128>}, {pipeline_mode = #tpu.pipeline_mode<synchronous>, transform_indices = @transform_4, window_bounds = array<i64: 128, 128>}]} {
    %c0 = arith.constant 0 : index
    %c0_0 = arith.constant 0 : index
    %0 = vector.load %arg1[%c0, %c0_0] : memref<128x128xf32, #tpu.memory_space<vmem>>, vector<128x128xf32>
    %c0_1 = arith.constant 0 : index
    %c0_2 = arith.constant 0 : index
    %1 = vector.load %arg2[%c0_1, %c0_2] : memref<128x128xf32, #tpu.memory_space<vmem>>, vector<128x128xf32>
    %cst = arith.constant dense<0.000000e+00> : vector<128x128xf32>
    %2 = tpu.matmul %0, %1, %cst {dimension_numbers = #tpu.dot_dimension_numbers<[1], [0], [0], [1], [0, 0, 1, 1], [], []>} : vector<128x128xf32>, vector<128x128xf32>, vector<128x128xf32> -> vector<128x128xf32>
    %3 = tpu.concatenate %1, %2 in 1 : vector<128x128xf32>, vector<128x128xf32> -> vector<128x256xf32>
    %c0_3 = arith.constant 0 : index
    %c0_4 = arith.constant 0 : index
    %c0_5 = arith.constant 0 : index
    %4 = vector.load %arg3[%c0_3, %c0_4, %c0_5] : memref<3x256x128xf32, #tpu.memory_space<vmem>>, vector<1x256x128xf32>
    %5 = vector.shape_cast %4 : vector<1x256x128xf32> to vector<256x128xf32>
    %cst_6 = arith.constant dense<0.000000e+00> : vector<128x128xf32>
    %6 = tpu.matmul %3, %5, %cst_6 {dimension_numbers = #tpu.dot_dimension_numbers<[1], [0], [0], [1], [0, 0, 1, 1], [], []>} : vector<128x256xf32>, vector<256x128xf32>, vector<128x128xf32> -> vector<128x128xf32>
    %c0_7 = arith.constant 0 : index
    %c0_8 = arith.constant 0 : index
    %c0_9 = arith.constant 0 : index
    %7 = vector.load %arg4[%c0_7, %c0_8, %c0_9] : memref<3x1x128xf32, #tpu.memory_space<vmem>>, vector<1x1x128xf32>
    %8 = vector.shape_cast %7 : vector<1x1x128xf32> to vector<1x128xf32>
    %9 = vector.broadcast %8 : vector<1x128xf32> to vector<128x128xf32>
    %10 = arith.addf %6, %9 : vector<128x128xf32>
    %11 = arith.mulf %10, %10 : vector<128x128xf32>
    %cst_10 = arith.constant dense<0.000000e+00> : vector<128xf32>
    %12 = vector.multi_reduction <add>, %11, %cst_10 [1] : vector<128x128xf32> to vector<128xf32>
    %13 = vector.shape_cast %12 : vector<128xf32> to vector<128x1xf32>
    %cst_11 = arith.constant 1.000000e-24 : f32
    %14 = vector.broadcast %cst_11 : f32 to vector<128x1xf32>
    %15 = arith.maximumf %13, %14 : vector<128x1xf32>
    %16 = math.rsqrt %15 : vector<128x1xf32>
    %17 = vector.broadcast %16 : vector<128x1xf32> to vector<128x128xf32>
    %18 = arith.mulf %10, %17 : vector<128x128xf32>
    %cst_12 = arith.constant 0.000000e+00 : f32
    %19 = vector.broadcast %cst_12 : f32 to vector<128x128xf32>
    %20 = arith.maximumf %18, %19 : vector<128x128xf32>
    %cst_13 = arith.constant dense<0.000000e+00> : vector<128x128xf32>
    %21 = tpu.matmul %0, %20, %cst_13 {dimension_numbers = #tpu.dot_dimension_numbers<[1], [0], [0], [1], [0, 0, 1, 1], [], []>} : vector<128x128xf32>, vector<128x128xf32>, vector<128x128xf32> -> vector<128x128xf32>
    %22 = tpu.concatenate %20, %21 in 1 : vector<128x128xf32>, vector<128x128xf32> -> vector<128x256xf32>
    %c1 = arith.constant 1 : index
    %c0_14 = arith.constant 0 : index
    %c0_15 = arith.constant 0 : index
    %23 = vector.load %arg3[%c1, %c0_14, %c0_15] : memref<3x256x128xf32, #tpu.memory_space<vmem>>, vector<1x256x128xf32>
    %24 = vector.shape_cast %23 : vector<1x256x128xf32> to vector<256x128xf32>
    %cst_16 = arith.constant dense<0.000000e+00> : vector<128x128xf32>
    %25 = tpu.matmul %22, %24, %cst_16 {dimension_numbers = #tpu.dot_dimension_numbers<[1], [0], [0], [1], [0, 0, 1, 1], [], []>} : vector<128x256xf32>, vector<256x128xf32>, vector<128x128xf32> -> vector<128x128xf32>
    %c1_17 = arith.constant 1 : index
    %c0_18 = arith.constant 0 : index
    %c0_19 = arith.constant 0 : index
    %26 = vector.load %arg4[%c1_17, %c0_18, %c0_19] : memref<3x1x128xf32, #tpu.memory_space<vmem>>, vector<1x1x128xf32>
    %27 = vector.shape_cast %26 : vector<1x1x128xf32> to vector<1x128xf32>
    %28 = vector.broadcast %27 : vector<1x128xf32> to vector<128x128xf32>
    %29 = arith.addf %25, %28 : vector<128x128xf32>
    %30 = arith.mulf %29, %29 : vector<128x128xf32>
    %cst_20 = arith.constant dense<0.000000e+00> : vector<128xf32>
    %31 = vector.multi_reduction <add>, %30, %cst_20 [1] : vector<128x128xf32> to vector<128xf32>
    %32 = vector.shape_cast %31 : vector<128xf32> to vector<128x1xf32>
    %cst_21 = arith.constant 1.000000e-24 : f32
    %33 = vector.broadcast %cst_21 : f32 to vector<128x1xf32>
    %34 = arith.maximumf %32, %33 : vector<128x1xf32>
    %35 = math.rsqrt %34 : vector<128x1xf32>
    %36 = vector.broadcast %35 : vector<128x1xf32> to vector<128x128xf32>
    %37 = arith.mulf %29, %36 : vector<128x128xf32>
    %cst_22 = arith.constant 0.000000e+00 : f32
    %38 = vector.broadcast %cst_22 : f32 to vector<128x128xf32>
    %39 = arith.maximumf %37, %38 : vector<128x128xf32>
    %40 = arith.addf %39, %20 : vector<128x128xf32>
    %cst_23 = arith.constant dense<0.000000e+00> : vector<128x128xf32>
    %41 = tpu.matmul %0, %40, %cst_23 {dimension_numbers = #tpu.dot_dimension_numbers<[1], [0], [0], [1], [0, 0, 1, 1], [], []>} : vector<128x128xf32>, vector<128x128xf32>, vector<128x128xf32> -> vector<128x128xf32>
    %42 = tpu.concatenate %40, %41 in 1 : vector<128x128xf32>, vector<128x128xf32> -> vector<128x256xf32>
    %c2 = arith.constant 2 : index
    %c0_24 = arith.constant 0 : index
    %c0_25 = arith.constant 0 : index
    %43 = vector.load %arg3[%c2, %c0_24, %c0_25] : memref<3x256x128xf32, #tpu.memory_space<vmem>>, vector<1x256x128xf32>
    %44 = vector.shape_cast %43 : vector<1x256x128xf32> to vector<256x128xf32>
    %cst_26 = arith.constant dense<0.000000e+00> : vector<128x128xf32>
    %45 = tpu.matmul %42, %44, %cst_26 {dimension_numbers = #tpu.dot_dimension_numbers<[1], [0], [0], [1], [0, 0, 1, 1], [], []>} : vector<128x256xf32>, vector<256x128xf32>, vector<128x128xf32> -> vector<128x128xf32>
    %c2_27 = arith.constant 2 : index
    %c0_28 = arith.constant 0 : index
    %c0_29 = arith.constant 0 : index
    %46 = vector.load %arg4[%c2_27, %c0_28, %c0_29] : memref<3x1x128xf32, #tpu.memory_space<vmem>>, vector<1x1x128xf32>
    %47 = vector.shape_cast %46 : vector<1x1x128xf32> to vector<1x128xf32>
    %48 = vector.broadcast %47 : vector<1x128xf32> to vector<128x128xf32>
    %49 = arith.addf %45, %48 : vector<128x128xf32>
    %50 = arith.mulf %49, %49 : vector<128x128xf32>
    %cst_30 = arith.constant dense<0.000000e+00> : vector<128xf32>
    %51 = vector.multi_reduction <add>, %50, %cst_30 [1] : vector<128x128xf32> to vector<128xf32>
    %52 = vector.shape_cast %51 : vector<128xf32> to vector<128x1xf32>
    %cst_31 = arith.constant 1.000000e-24 : f32
    %53 = vector.broadcast %cst_31 : f32 to vector<128x1xf32>
    %54 = arith.maximumf %52, %53 : vector<128x1xf32>
    %55 = math.rsqrt %54 : vector<128x1xf32>
    %56 = vector.broadcast %55 : vector<128x1xf32> to vector<128x128xf32>
    %57 = arith.mulf %49, %56 : vector<128x128xf32>
    %c0_32 = arith.constant 0 : index
    %c0_33 = arith.constant 0 : index
    %58 = vector.load %arg5[%c0_32, %c0_33] : memref<128x128xf32, #tpu.memory_space<vmem>>, vector<128x128xf32>
    tpu.vector_store %arg5[%c0_32, %c0_33], %57 {strides = array<i32>} : memref<128x128xf32, #tpu.memory_space<vmem>>, vector<128x128xf32>,
    return
  }
  func.func @transform_0(%arg0: i32) -> (i32, i32) {
    %c0_i32 = arith.constant 0 : i32
    %c0_i32_0 = arith.constant 0 : i32
    %c0_i32_1 = arith.constant 0 : i32
    return %c0_i32, %c0_i32_0 : i32, i32
  }
  func.func @transform_1(%arg0: i32) -> (i32, i32) {
    %c0_i32 = arith.constant 0 : i32
    %c0_i32_0 = arith.constant 0 : i32
    %c0_i32_1 = arith.constant 0 : i32
    return %c0_i32, %c0_i32_0 : i32, i32
  }
  func.func @transform_2(%arg0: i32) -> (i32, i32, i32) {
    %c0_i32 = arith.constant 0 : i32
    %c0_i32_0 = arith.constant 0 : i32
    %c0_i32_1 = arith.constant 0 : i32
    %c0_i32_2 = arith.constant 0 : i32
    return %c0_i32, %c0_i32_0, %c0_i32_1 : i32, i32, i32
  }
  func.func @transform_3(%arg0: i32) -> (i32, i32, i32) {
    %c0_i32 = arith.constant 0 : i32
    %c0_i32_0 = arith.constant 0 : i32
    %c0_i32_1 = arith.constant 0 : i32
    %c0_i32_2 = arith.constant 0 : i32
    return %c0_i32, %c0_i32_0, %c0_i32_1 : i32, i32, i32
  }
  func.func @transform_4(%arg0: i32) -> (i32, i32) {
    %c0_i32 = arith.constant 0 : i32
    %c0_i32_0 = arith.constant 0 : i32
    %c0_i32_1 = arith.constant 0 : i32
    return %c0_i32, %c0_i32_0 : i32, i32
  }
}

</mosaic_0001>

<llo_original>
// kernel: tpu_custom_call.1
$region0: #{tpu_custom_call.1}
  #allocation0 [shape = 'u32[]', space=smem, size = 0x4, offset = 0x4, fixed_abs, tag = 'smem constant byte address 0x4 - core index']
  #allocation1 [shape = 'u32[72,128]{1,0:T(1,128)}', space=vmem, size = 0x9000, scoped, tag = 'internal scratch']
  %s0 = inlined_call_operand.hbm [shape: f32[128,128], index: 0, kind: input, shape index: {}]
  %s1 = inlined_call_operand.hbm [shape: f32[128,128], index: 1, kind: input, shape index: {}]
  %s2 = inlined_call_operand.hbm [shape: f32[3,256,128], index: 2, kind: input, shape index: {}]
  %s3 = inlined_call_operand.hbm [shape: f32[3,1,128], index: 3, kind: input, shape index: {}]
  %s4 = inlined_call_operand.hbm [shape: f32[128,128], index: 4, kind: output, shape index: {}]
  %s5 = sld [smem:[#allocation0]]
  $region42: #{tpu_custom_call.1} parent=0
    _
  %s7 = ssub.s32 1, %s5
  %s8 = scalar_select 0, %s7, %s5
  $region1: #{tpu_custom_call.1} parent=0
    #allocation2 [shape = 'u8[65536]{0}', space=vmem, size = 0x10000, scoped, tag = 'input window, operand 0, single buffered']
    #allocation3 [shape = 's32[1]{0}', space=sflag, size = 0x4, scoped, tag = 'scoped memory for tpu_custom_call.1']
    #allocation4 [shape = 's32[1]{0}', space=sflag, size = 0x4, scoped, tag = 'scoped memory for tpu_custom_call.1']
    #allocation5 [shape = 'u8[65536]{0}', space=vmem, size = 0x10000, scoped, tag = 'input window, operand 1, single buffered']
    #allocation6 [shape = 's32[1]{0}', space=sflag, size = 0x4, scoped, tag = 'scoped memory for tpu_custom_call.1']
    #allocation7 [shape = 'u8[393216]{0}', space=vmem, size = 0x60000, scoped, tag = 'input window, operand 2, single buffered']
    #allocation8 [shape = 'u8[1536]{0}', space=vmem, size = 0x800, scoped, tag = 'input window, operand 3, single buffered']
    #allocation9 [shape = 's32[1]{0}', space=sflag, size = 0x4, scoped, tag = 'scoped memory for tpu_custom_call.1']
    #allocation10 [shape = 'u8[65536]{0}', space=vmem, size = 0x10000, scoped, tag = 'output window, operand 0, single buffered']
    %9 = vsyncpa [#allocation3], 0
    %10 = vsyncpa [#allocation6], 0
    %11 = vsyncpa [#allocation9], 0
    %12 = vsyncpa [#allocation4], 0
    // Predicated region
    $region2: #{tpu_custom_call.1} parent=1 // pred_check
      _
    $region3: #{tpu_custom_call.1} parent=1 // pred_check_branch
      %14 = sbr.rel (0) target = $region5
    $region4: #{tpu_custom_call.1} parent=1 // pred_region
      %16 = vsyncadd [#allocation3], 0
      %s17 = sshll.u32 %s0, 4
      %s18 = int_to_ptr.hbm [resolvable:$true] %s17
      %s19 = sshll.u32 [#allocation2], 4
      %s20 = int_to_ptr.vmem [resolvable:$true] %s19
      %25 = dma.hbm_to_vmem [thread:$0]  %s18, 2048, %s20, [#allocation3], 128, 128, 8
    $region5: #{tpu_custom_call.1} parent=1 // pred_fallthru
      _
    // Predicated region
    $region6: #{tpu_custom_call.1} parent=1 // pred_check
      _
    $region7: #{tpu_custom_call.1} parent=1 // pred_check_branch
      %27 = sbr.rel (0) target = $region9
    $region8: #{tpu_custom_call.1} parent=1 // pred_region
      %29 = vsyncadd [#allocation6], 0
      %s30 = sshll.u32 %s1, 4
      %s31 = int_to_ptr.hbm [resolvable:$true] %s30
      %s32 = sshll.u32 [#allocation5], 4
      %s33 = int_to_ptr.vmem [resolvable:$true] %s32
      %38 = dma.hbm_to_vmem [thread:$0]  %s31, 2048, %s33, [#allocation6], 128, 128, 8
    $region9: #{tpu_custom_call.1} parent=1 // pred_fallthru
      _
    // Predicated region
    $region10: #{tpu_custom_call.1} parent=1 // pred_check
      _
    $region11: #{tpu_custom_call.1} parent=1 // pred_check_branch
      %40 = sbr.rel (0) target = $region13
    $region12: #{tpu_custom_call.1} parent=1 // pred_region
      %42 = vsyncadd [#allocation6], 0
      %s43 = sshll.u32 %s2, 4
      %s44 = int_to_ptr.hbm [resolvable:$true] %s43
      %s45 = sshll.u32 [#allocation7], 4
      %s46 = int_to_ptr.vmem [resolvable:$true] %s45
      %51 = dma.hbm_to_vmem [thread:$0]  %s44, 12288, %s46, [#allocation6], 128, 128, 8
    $region13: #{tpu_custom_call.1} parent=1 // pred_fallthru
      _
    // Predicated region
    $region14: #{tpu_custom_call.1} parent=1 // pred_check
      _
    $region15: #{tpu_custom_call.1} parent=1 // pred_check_branch
      %53 = sbr.rel (0) target = $region17
    $region16: #{tpu_custom_call.1} parent=1 // pred_region
      %55 = vsyncadd [#allocation9], 0
      %s56 = sshll.u32 %s3, 4
      %s57 = int_to_ptr.hbm [resolvable:$true] %s56
      %s58 = sshll.u32 [#allocation8], 4
      %s59 = int_to_ptr.vmem [resolvable:$true] %s58
      %64 = dma.hbm_to_vmem [thread:$0]  %s57, 48, %s59, [#allocation9], 16, 16, 1
    $region17: #{tpu_custom_call.1} parent=1 // pred_fallthru
      _
    // Predicated region
    $region18: #{tpu_custom_call.1} parent=1 // pred_check
      _
    $region19: #{tpu_custom_call.1} parent=1 // pred_check_branch
      %66 = sbr.rel (0) target = $region21
    $region20: #{tpu_custom_call.1} parent=1 // pred_region
      %68 = dma.done [#allocation3], 2048
    $region21: #{tpu_custom_call.1} parent=1 // pred_fallthru
      _
    // Predicated region
    $region22: #{tpu_custom_call.1} parent=1 // pred_check
      _
    $region23: #{tpu_custom_call.1} parent=1 // pred_check_branch
      %70 = sbr.rel (0) target = $region25
    $region24: #{tpu_custom_call.1} parent=1 // pred_region
      %72 = dma.done [#allocation6], 2048
    $region25: #{tpu_custom_call.1} parent=1 // pred_fallthru
      _
    // Predicated region
    $region26: #{tpu_custom_call.1} parent=1 // pred_check
      _
    $region27: #{tpu_custom_call.1} parent=1 // pred_check_branch
      %74 = sbr.rel (0) target = $region29
    $region28: #{tpu_custom_call.1} parent=1 // pred_region
      %76 = dma.done [#allocation6], 12288
    $region29: #{tpu_custom_call.1} parent=1 // pred_fallthru
      _
    // Predicated region
    $region30: #{tpu_custom_call.1} parent=1 // pred_check
      _
    $region31: #{tpu_custom_call.1} parent=1 // pred_check_branch
      %78 = sbr.rel (0) target = $region33
    $region32: #{tpu_custom_call.1} parent=1 // pred_region
      %80 = dma.done [#allocation9], 48
    $region33: #{tpu_custom_call.1} parent=1 // pred_fallthru
      _
    %v81 = vld [vmem:[#allocation2] sm:$0xff]
    %v82 = vld [vmem:[#allocation2 + $0x8] sm:$0xff]
    %v83 = vld [vmem:[#allocation2 + $0x10] sm:$0xff]
    %v84 = vld [vmem:[#allocation2 + $0x18] sm:$0xff]
    %v85 = vld [vmem:[#allocation2 + $0x20] sm:$0xff]
    %v86 = vld [vmem:[#allocation2 + $0x28] sm:$0xff]
    %v87 = vld [vmem:[#allocation2 + $0x30] sm:$0xff]
    %v88 = vld [vmem:[#allocation2 + $0x38] sm:$0xff]
    %v89 = vld [vmem:[#allocation2 + $0x40] sm:$0xff]
    %v90 = vld [vmem:[#allocation2 + $0x48] sm:$0xff]
    %v91 = vld [vmem:[#allocation2 + $0x50] sm:$0xff]
    %v92 = vld [vmem:[#allocation2 + $0x58] sm:$0xff]
    %v93 = vld [vmem:[#allocation2 + $0x60] sm:$0xff]
    %v94 = vld [vmem:[#allocation2 + $0x68] sm:$0xff]
    %v95 = vld [vmem:[#allocation2 + $0x70] sm:$0xff]
    %v96 = vld [vmem:[#allocation2 + $0x78] sm:$0xff]
    %v97 = vld [vmem:[#allocation5] sm:$0xff]
    %v98 = vld [vmem:[#allocation5 + $0x8] sm:$0xff]
    %v99 = vld [vmem:[#allocation5 + $0x10] sm:$0xff]
    %v100 = vld [vmem:[#allocation5 + $0x18] sm:$0xff]
    %v101 = vld [vmem:[#allocation5 + $0x20] sm:$0xff]
    %v102 = vld [vmem:[#allocation5 + $0x28] sm:$0xff]
    %v103 = vld [vmem:[#allocation5 + $0x30] sm:$0xff]
    %v104 = vld [vmem:[#allocation5 + $0x38] sm:$0xff]
    %v105 = vld [vmem:[#allocation5 + $0x40] sm:$0xff]
    %v106 = vld [vmem:[#allocation5 + $0x48] sm:$0xff]
    %v107 = vld [vmem:[#allocation5 + $0x50] sm:$0xff]
    %v108 = vld [vmem:[#allocation5 + $0x58] sm:$0xff]
    %v109 = vld [vmem:[#allocation5 + $0x60] sm:$0xff]
    %v110 = vld [vmem:[#allocation5 + $0x68] sm:$0xff]
    %v111 = vld [vmem:[#allocation5 + $0x70] sm:$0xff]
    %v112 = vld [vmem:[#allocation5 + $0x78] sm:$0xff]
    %113 = vmatpush.msra.mxu0 %v112
    %114 = vmatpush.msra.mxu0 %v111
    %115 = vmatpush.msra.mxu0 %v110
    %116 = vmatpush.msra.mxu0 %v109
    %117 = vmatpush.msra.mxu0 %v108
    %118 = vmatpush.msra.mxu0 %v107
    %119 = vmatpush.msra.mxu0 %v106
    %120 = vmatpush.msra.mxu0 %v105
    %121 = vmatpush.msra.mxu0 %v104
    %122 = vmatpush.msra.mxu0 %v103
    %123 = vmatpush.msra.mxu0 %v102
    %124 = vmatpush.msra.mxu0 %v101
    %125 = vmatpush.msra.mxu0 %v100
    %126 = vmatpush.msra.mxu0 %v99
    %127 = vmatpush.msra.mxu0 %v98
    %128 = vmatpush.msra.mxu0 %v97
    %129 = vmatmul.f32.gmra.mxu0 %v81
    %v130 = vpop.f32.mrf.mxu0
    %v131 = vadd.f32 0.0, %v130
    %132 = vmatmul.f32.gmra.mxu0 %v82
    %v133 = vpop.f32.mrf.mxu0
    %v134 = vadd.f32 0.0, %v133
    %135 = vmatmul.f32.gmra.mxu0 %v83
    %v136 = vpop.f32.mrf.mxu0
    %v137 = vadd.f32 0.0, %v136
    %138 = vmatmul.f32.gmra.mxu0 %v84
    %v139 = vpop.f32.mrf.mxu0
    %v140 = vadd.f32 0.0, %v139
    %141 = vmatmul.f32.gmra.mxu0 %v85
    %v142 = vpop.f32.mrf.mxu0
    %v143 = vadd.f32 0.0, %v142
    %144 = vmatmul.f32.gmra.mxu0 %v86
    %v145 = vpop.f32.mrf.mxu0
    %v146 = vadd.f32 0.0, %v145
    %147 = vmatmul.f32.gmra.mxu0 %v87
    %v148 = vpop.f32.mrf.mxu0
    %v149 = vadd.f32 0.0, %v148
    %150 = vmatmul.f32.gmra.mxu0 %v88
    %v151 = vpop.f32.mrf.mxu0
    %v152 = vadd.f32 0.0, %v151
    %153 = vmatmul.f32.gmra.mxu0 %v89
    %v154 = vpop.f32.mrf.mxu0
    %v155 = vadd.f32 0.0, %v154
    %156 = vmatmul.f32.gmra.mxu0 %v90
    %v157 = vpop.f32.mrf.mxu0
    %v158 = vadd.f32 0.0, %v157
    %159 = vmatmul.f32.gmra.mxu0 %v91
    %v160 = vpop.f32.mrf.mxu0
    %v161 = vadd.f32 0.0, %v160
    %162 = vmatmul.f32.gmra.mxu0 %v92
    %v163 = vpop.f32.mrf.mxu0
    %v164 = vadd.f32 0.0, %v163
    %165 = vmatmul.f32.gmra.mxu0 %v93
    %v166 = vpop.f32.mrf.mxu0
    %v167 = vadd.f32 0.0, %v166
    %168 = vmatmul.f32.gmra.mxu0 %v94
    %v169 = vpop.f32.mrf.mxu0
    %v170 = vadd.f32 0.0, %v169
    %171 = vmatmul.f32.gmra.mxu0 %v95
    %v172 = vpop.f32.mrf.mxu0
    %v173 = vadd.f32 0.0, %v172
    %174 = vmatmul.f32.gmra.mxu0 %v96
    %v175 = vpop.f32.mrf.mxu0
    %v176 = vadd.f32 0.0, %v175
    %177 = vdwg.mxu0
    %v178 = vld [vmem:[#allocation7] sm:$0xff]
    %v179 = vld [vmem:[#allocation7 + $0x8] sm:$0xff]
    %v180 = vld [vmem:[#allocation7 + $0x10] sm:$0xff]
    %v181 = vld [vmem:[#allocation7 + $0x18] sm:$0xff]
    %v182 = vld [vmem:[#allocation7 + $0x20] sm:$0xff]
    %v183 = vld [vmem:[#allocation7 + $0x28] sm:$0xff]
    %v184 = vld [vmem:[#allocation7 + $0x30] sm:$0xff]
    %v185 = vld [vmem:[#allocation7 + $0x38] sm:$0xff]
    %v186 = vld [vmem:[#allocation7 + $0x40] sm:$0xff]
    %v187 = vld [vmem:[#allocation7 + $0x48] sm:$0xff]
    %v188 = vld [vmem:[#allocation7 + $0x50] sm:$0xff]
    %v189 = vld [vmem:[#allocation7 + $0x58] sm:$0xff]
    %v190 = vld [vmem:[#allocation7 + $0x60] sm:$0xff]
    %v191 = vld [vmem:[#allocation7 + $0x68] sm:$0xff]
    %v192 = vld [vmem:[#allocation7 + $0x70] sm:$0xff]
    %v193 = vld [vmem:[#allocation7 + $0x78] sm:$0xff]
    %v194 = vld [vmem:[#allocation7 + $0x80] sm:$0xff]
    %v195 = vld [vmem:[#allocation7 + $0x88] sm:$0xff]
    %v196 = vld [vmem:[#allocation7 + $0x90] sm:$0xff]
    %v197 = vld [vmem:[#allocation7 + $0x98] sm:$0xff]
    %v198 = vld [vmem:[#allocation7 + $0xa0] sm:$0xff]
    %v199 = vld [vmem:[#allocation7 + $0xa8] sm:$0xff]
    %v200 = vld [vmem:[#allocation7 + $0xb0] sm:$0xff]
    %v201 = vld [vmem:[#allocation7 + $0xb8] sm:$0xff]
    %v202 = vld [vmem:[#allocation7 + $0xc0] sm:$0xff]
    %v203 = vld [vmem:[#allocation7 + $0xc8] sm:$0xff]
    %v204 = vld [vmem:[#allocation7 + $0xd0] sm:$0xff]
    %v205 = vld [vmem:[#allocation7 + $0xd8] sm:$0xff]
    %v206 = vld [vmem:[#allocation7 + $0xe0] sm:$0xff]
    %v207 = vld [vmem:[#allocation7 + $0xe8] sm:$0xff]
    %v208 = vld [vmem:[#allocation7 + $0xf0] sm:$0xff]
    %v209 = vld [vmem:[#allocation7 + $0xf8] sm:$0xff]
    %v210 = vld [vmem:[#allocation8] sm:$0x1]
    %v212 = vperm.slane %v210, 0
    %214 = vmatpush.msra.mxu0 %v193
    %215 = vmatpush.msra.mxu0 %v192
    %216 = vmatpush.msra.mxu0 %v191
    %217 = vmatpush.msra.mxu0 %v190
    %218 = vmatpush.msra.mxu0 %v189
    %219 = vmatpush.msra.mxu0 %v188
    %220 = vmatpush.msra.mxu0 %v187
    %221 = vmatpush.msra.mxu0 %v186
    %222 = vmatpush.msra.mxu0 %v185
    %223 = vmatpush.msra.mxu0 %v184
    %224 = vmatpush.msra.mxu0 %v183
    %225 = vmatpush.msra.mxu0 %v182
    %226 = vmatpush.msra.mxu0 %v181
    %227 = vmatpush.msra.mxu0 %v180
    %228 = vmatpush.msra.mxu0 %v179
    %229 = vmatpush.msra.mxu0 %v178
    %230 = vmatmul.f32.gmra.mxu0 %v97
    %v231 = vpop.f32.mrf.mxu0
    %v232 = vadd.f32 %v212, %v231
    %233 = vmatmul.f32.gmra.mxu0 %v98
    %v234 = vpop.f32.mrf.mxu0
    %v235 = vadd.f32 %v212, %v234
    %236 = vmatmul.f32.gmra.mxu0 %v99
    %v237 = vpop.f32.mrf.mxu0
    %v238 = vadd.f32 %v212, %v237
    %239 = vmatmul.f32.gmra.mxu0 %v100
    %v240 = vpop.f32.mrf.mxu0
    %v241 = vadd.f32 %v212, %v240
    %242 = vmatmul.f32.gmra.mxu0 %v101
    %v243 = vpop.f32.mrf.mxu0
    %v244 = vadd.f32 %v212, %v243
    %245 = vmatmul.f32.gmra.mxu0 %v102
    %v246 = vpop.f32.mrf.mxu0
    %v247 = vadd.f32 %v212, %v246
    %248 = vmatmul.f32.gmra.mxu0 %v103
    %v249 = vpop.f32.mrf.mxu0
    %v250 = vadd.f32 %v212, %v249
    %251 = vmatmul.f32.gmra.mxu0 %v104
    %v252 = vpop.f32.mrf.mxu0
    %v253 = vadd.f32 %v212, %v252
    %254 = vmatmul.f32.gmra.mxu0 %v105
    %v255 = vpop.f32.mrf.mxu0
    %v256 = vadd.f32 %v212, %v255
    %257 = vmatmul.f32.gmra.mxu0 %v106
    %v258 = vpop.f32.mrf.mxu0
    %v259 = vadd.f32 %v212, %v258
    %260 = vmatmul.f32.gmra.mxu0 %v107
    %v261 = vpop.f32.mrf.mxu0
    %v262 = vadd.f32 %v212, %v261
    %263 = vmatmul.f32.gmra.mxu0 %v108
    %v264 = vpop.f32.mrf.mxu0
    %v265 = vadd.f32 %v212, %v264
    %266 = vmatmul.f32.gmra.mxu0 %v109
    %v267 = vpop.f32.mrf.mxu0
    %v268 = vadd.f32 %v212, %v267
    %269 = vmatmul.f32.gmra.mxu0 %v110
    %v270 = vpop.f32.mrf.mxu0
    %v271 = vadd.f32 %v212, %v270
    %272 = vmatmul.f32.gmra.mxu0 %v111
    %v273 = vpop.f32.mrf.mxu0
    %v274 = vadd.f32 %v212, %v273
    %275 = vmatmul.f32.gmra.mxu0 %v112
    %v276 = vpop.f32.mrf.mxu0
    %v277 = vadd.f32 %v212, %v276
    %278 = vdwg.mxu0
    %279 = vmatpush.msra.mxu0 %v209
    %280 = vmatpush.msra.mxu0 %v208
    %281 = vmatpush.msra.mxu0 %v207
    %282 = vmatpush.msra.mxu0 %v206
    %283 = vmatpush.msra.mxu0 %v205
    %284 = vmatpush.msra.mxu0 %v204
    %285 = vmatpush.msra.mxu0 %v203
    %286 = vmatpush.msra.mxu0 %v202
    %287 = vmatpush.msra.mxu0 %v201
    %288 = vmatpush.msra.mxu0 %v200
    %289 = vmatpush.msra.mxu0 %v199
    %290 = vmatpush.msra.mxu0 %v198
    %291 = vmatpush.msra.mxu0 %v197
    %292 = vmatpush.msra.mxu0 %v196
    %293 = vmatpush.msra.mxu0 %v195
    %294 = vmatpush.msra.mxu0 %v194
    %295 = vmatmul.f32.gmra.mxu0 %v131
    %v296 = vpop.f32.mrf.mxu0
    %v297 = vadd.f32 %v232, %v296
    %298 = vmatmul.f32.gmra.mxu0 %v134
    %v299 = vpop.f32.mrf.mxu0
    %v300 = vadd.f32 %v235, %v299
    %301 = vmatmul.f32.gmra.mxu0 %v137
    %v302 = vpop.f32.mrf.mxu0
    %v303 = vadd.f32 %v238, %v302
    %304 = vmatmul.f32.gmra.mxu0 %v140
    %v305 = vpop.f32.mrf.mxu0
    %v306 = vadd.f32 %v241, %v305
    %307 = vmatmul.f32.gmra.mxu0 %v143
    %v308 = vpop.f32.mrf.mxu0
    %v309 = vadd.f32 %v244, %v308
    %310 = vmatmul.f32.gmra.mxu0 %v146
    %v311 = vpop.f32.mrf.mxu0
    %v312 = vadd.f32 %v247, %v311
    %313 = vmatmul.f32.gmra.mxu0 %v149
    %v314 = vpop.f32.mrf.mxu0
    %v315 = vadd.f32 %v250, %v314
    %316 = vmatmul.f32.gmra.mxu0 %v152
    %v317 = vpop.f32.mrf.mxu0
    %v318 = vadd.f32 %v253, %v317
    %319 = vmatmul.f32.gmra.mxu0 %v155
    %v320 = vpop.f32.mrf.mxu0
    %v321 = vadd.f32 %v256, %v320
    %322 = vmatmul.f32.gmra.mxu0 %v158
    %v323 = vpop.f32.mrf.mxu0
    %v324 = vadd.f32 %v259, %v323
    %325 = vmatmul.f32.gmra.mxu0 %v161
    %v326 = vpop.f32.mrf.mxu0
    %v327 = vadd.f32 %v262, %v326
    %328 = vmatmul.f32.gmra.mxu0 %v164
    %v329 = vpop.f32.mrf.mxu0
    %v330 = vadd.f32 %v265, %v329
    %331 = vmatmul.f32.gmra.mxu0 %v167
    %v332 = vpop.f32.mrf.mxu0
    %v333 = vadd.f32 %v268, %v332
    %334 = vmatmul.f32.gmra.mxu0 %v170
    %v335 = vpop.f32.mrf.mxu0
    %v336 = vadd.f32 %v271, %v335
    %337 = vmatmul.f32.gmra.mxu0 %v173
    %v338 = vpop.f32.mrf.mxu0
    %v339 = vadd.f32 %v274, %v338
    %340 = vmatmul.f32.gmra.mxu0 %v176
    %v341 = vpop.f32.mrf.mxu0
    %v342 = vadd.f32 %v277, %v341
    %343 = vdwg.mxu0
    %v344 = vmul.f32 %v297, %v297
    %v345 = vmul.f32 %v300, %v300
    %v346 = vmul.f32 %v303, %v303
    %v347 = vmul.f32 %v306, %v306
    %v348 = vmul.f32 %v309, %v309
    %v349 = vmul.f32 %v312, %v312
    %v350 = vmul.f32 %v315, %v315
    %v351 = vmul.f32 %v318, %v318
    %v352 = vmul.f32 %v321, %v321
    %v353 = vmul.f32 %v324, %v324
    %v354 = vmul.f32 %v327, %v327
    %v355 = vmul.f32 %v330, %v330
    %v356 = vmul.f32 %v333, %v333
    %v357 = vmul.f32 %v336, %v336
    %v358 = vmul.f32 %v339, %v339
    %v359 = vmul.f32 %v342, %v342
    %360 = vadd.xlane.f32.xlu0 %v344
    %v361 = vpop.xlane.xlu0 %360
    %362 = vadd.xlane.f32.xlu0 %v345
    %v363 = vpop.xlane.xlu0 %362
    %364 = vadd.xlane.f32.xlu0 %v346
    %v365 = vpop.xlane.xlu0 %364
    %366 = vadd.xlane.f32.xlu0 %v347
    %v367 = vpop.xlane.xlu0 %366
    %368 = vadd.xlane.f32.xlu0 %v348
    %v369 = vpop.xlane.xlu0 %368
    %370 = vadd.xlane.f32.xlu0 %v349
    %v371 = vpop.xlane.xlu0 %370
    %372 = vadd.xlane.f32.xlu0 %v350
    %v373 = vpop.xlane.xlu0 %372
    %374 = vadd.xlane.f32.xlu0 %v351
    %v375 = vpop.xlane.xlu0 %374
    %376 = vadd.xlane.f32.xlu0 %v352
    %v377 = vpop.xlane.xlu0 %376
    %378 = vadd.xlane.f32.xlu0 %v353
    %v379 = vpop.xlane.xlu0 %378
    %380 = vadd.xlane.f32.xlu0 %v354
    %v381 = vpop.xlane.xlu0 %380
    %382 = vadd.xlane.f32.xlu0 %v355
    %v383 = vpop.xlane.xlu0 %382
    %384 = vadd.xlane.f32.xlu0 %v356
    %v385 = vpop.xlane.xlu0 %384
    %386 = vadd.xlane.f32.xlu0 %v357
    %v387 = vpop.xlane.xlu0 %386
    %388 = vadd.xlane.f32.xlu0 %v358
    %v389 = vpop.xlane.xlu0 %388
    %390 = vadd.xlane.f32.xlu0 %v359
    %v391 = vpop.xlane.xlu0 %390
    %v392 = vmax.f32 %v361, 1e-24
    %v393 = vmax.f32 %v363, 1e-24
    %v394 = vmax.f32 %v365, 1e-24
    %v395 = vmax.f32 %v367, 1e-24
    %v396 = vmax.f32 %v369, 1e-24
    %v397 = vmax.f32 %v371, 1e-24
    %v398 = vmax.f32 %v373, 1e-24
    %v399 = vmax.f32 %v375, 1e-24
    %v400 = vmax.f32 %v377, 1e-24
    %v401 = vmax.f32 %v379, 1e-24
    %v402 = vmax.f32 %v381, 1e-24
    %v403 = vmax.f32 %v383, 1e-24
    %v404 = vmax.f32 %v385, 1e-24
    %v405 = vmax.f32 %v387, 1e-24
    %v406 = vmax.f32 %v389, 1e-24
    %v407 = vmax.f32 %v391, 1e-24
    %v408 = vrsqrt.pop %v392
    %v409 = vmul.f32 %v408, %v392
    %v410 = vmul.f32 %v409, %v408
    %v411 = vmul.f32 0.5, %v410
    %v412 = vsub.f32 1.5, %v411
    %v413 = vmul.f32 %v408, %v412
    %vm414 = vweird.f32 %v392
    %vm415 = vweird.f32 %v408
    %vm416 = vmor %vm414, %vm415
    %v417 = vsel %vm416, %v408, %v413
    %v418 = vrsqrt.pop %v393
    %v419 = vmul.f32 %v418, %v393
    %v420 = vmul.f32 %v419, %v418
    %v421 = vmul.f32 0.5, %v420
    %v422 = vsub.f32 1.5, %v421
    %v423 = vmul.f32 %v418, %v422
    %vm424 = vweird.f32 %v393
    %vm425 = vweird.f32 %v418
    %vm426 = vmor %vm424, %vm425
    %v427 = vsel %vm426, %v418, %v423
    %v428 = vrsqrt.pop %v394
    %v429 = vmul.f32 %v428, %v394
    %v430 = vmul.f32 %v429, %v428
    %v431 = vmul.f32 0.5, %v430
    %v432 = vsub.f32 1.5, %v431
    %v433 = vmul.f32 %v428, %v432
    %vm434 = vweird.f32 %v394
    %vm435 = vweird.f32 %v428
    %vm436 = vmor %vm434, %vm435
    %v437 = vsel %vm436, %v428, %v433
    %v438 = vrsqrt.pop %v395
    %v439 = vmul.f32 %v438, %v395
    %v440 = vmul.f32 %v439, %v438
    %v441 = vmul.f32 0.5, %v440
    %v442 = vsub.f32 1.5, %v441
    %v443 = vmul.f32 %v438, %v442
    %vm444 = vweird.f32 %v395
    %vm445 = vweird.f32 %v438
    %vm446 = vmor %vm444, %vm445
    %v447 = vsel %vm446, %v438, %v443
    %v448 = vrsqrt.pop %v396
    %v449 = vmul.f32 %v448, %v396
    %v450 = vmul.f32 %v449, %v448
    %v451 = vmul.f32 0.5, %v450
    %v452 = vsub.f32 1.5, %v451
    %v453 = vmul.f32 %v448, %v452
    %vm454 = vweird.f32 %v396
    %vm455 = vweird.f32 %v448
    %vm456 = vmor %vm454, %vm455
    %v457 = vsel %vm456, %v448, %v453
    %v458 = vrsqrt.pop %v397
    %v459 = vmul.f32 %v458, %v397
    %v460 = vmul.f32 %v459, %v458
    %v461 = vmul.f32 0.5, %v460
    %v462 = vsub.f32 1.5, %v461
    %v463 = vmul.f32 %v458, %v462
    %vm464 = vweird.f32 %v397
    %vm465 = vweird.f32 %v458
    %vm466 = vmor %vm464, %vm465
    %v467 = vsel %vm466, %v458, %v463
    %v468 = vrsqrt.pop %v398
    %v469 = vmul.f32 %v468, %v398
    %v470 = vmul.f32 %v469, %v468
    %v471 = vmul.f32 0.5, %v470
    %v472 = vsub.f32 1.5, %v471
    %v473 = vmul.f32 %v468, %v472
    %vm474 = vweird.f32 %v398
    %vm475 = vweird.f32 %v468
    %vm476 = vmor %vm474, %vm475
    %v477 = vsel %vm476, %v468, %v473
    %v478 = vrsqrt.pop %v399
    %v479 = vmul.f32 %v478, %v399
    %v480 = vmul.f32 %v479, %v478
    %v481 = vmul.f32 0.5, %v480
    %v482 = vsub.f32 1.5, %v481
    %v483 = vmul.f32 %v478, %v482
    %vm484 = vweird.f32 %v399
    %vm485 = vweird.f32 %v478
    %vm486 = vmor %vm484, %vm485
    %v487 = vsel %vm486, %v478, %v483
    %v488 = vrsqrt.pop %v400
    %v489 = vmul.f32 %v488, %v400
    %v490 = vmul.f32 %v489, %v488
    %v491 = vmul.f32 0.5, %v490
    %v492 = vsub.f32 1.5, %v491
    %v493 = vmul.f32 %v488, %v492
    %vm494 = vweird.f32 %v400
    %vm495 = vweird.f32 %v488
    %vm496 = vmor %vm494, %vm495
    %v497 = vsel %vm496, %v488, %v493
    %v498 = vrsqrt.pop %v401
    %v499 = vmul.f32 %v498, %v401
    %v500 = vmul.f32 %v499, %v498
    %v501 = vmul.f32 0.5, %v500
    %v502 = vsub.f32 1.5, %v501
    %v503 = vmul.f32 %v498, %v502
    %vm504 = vweird.f32 %v401
    %vm505 = vweird.f32 %v498
    %vm506 = vmor %vm504, %vm505
    %v507 = vsel %vm506, %v498, %v503
    %v508 = vrsqrt.pop %v402
    %v509 = vmul.f32 %v508, %v402
    %v510 = vmul.f32 %v509, %v508
    %v511 = vmul.f32 0.5, %v510
    %v512 = vsub.f32 1.5, %v511
    %v513 = vmul.f32 %v508, %v512
    %vm514 = vweird.f32 %v402
    %vm515 = vweird.f32 %v508
    %vm516 = vmor %vm514, %vm515
    %v517 = vsel %vm516, %v508, %v513
    %v518 = vrsqrt.pop %v403
    %v519 = vmul.f32 %v518, %v403
    %v520 = vmul.f32 %v519, %v518
    %v521 = vmul.f32 0.5, %v520
    %v522 = vsub.f32 1.5, %v521
    %v523 = vmul.f32 %v518, %v522
    %vm524 = vweird.f32 %v403
    %vm525 = vweird.f32 %v518
    %vm526 = vmor %vm524, %vm525
    %v527 = vsel %vm526, %v518, %v523
    %v528 = vrsqrt.pop %v404
    %v529 = vmul.f32 %v528, %v404
    %v530 = vmul.f32 %v529, %v528
    %v531 = vmul.f32 0.5, %v530
    %v532 = vsub.f32 1.5, %v531
    %v533 = vmul.f32 %v528, %v532
    %vm534 = vweird.f32 %v404
    %vm535 = vweird.f32 %v528
    %vm536 = vmor %vm534, %vm535
    %v537 = vsel %vm536, %v528, %v533
    %v538 = vrsqrt.pop %v405
    %v539 = vmul.f32 %v538, %v405
    %v540 = vmul.f32 %v539, %v538
    %v541 = vmul.f32 0.5, %v540
    %v542 = vsub.f32 1.5, %v541
    %v543 = vmul.f32 %v538, %v542
    %vm544 = vweird.f32 %v405
    %vm545 = vweird.f32 %v538
    %vm546 = vmor %vm544, %vm545
    %v547 = vsel %vm546, %v538, %v543
    %v548 = vrsqrt.pop %v406
    %v549 = vmul.f32 %v548, %v406
    %v550 = vmul.f32 %v549, %v548
    %v551 = vmul.f32 0.5, %v550
    %v552 = vsub.f32 1.5, %v551
    %v553 = vmul.f32 %v548, %v552
    %vm554 = vweird.f32 %v406
    %vm555 = vweird.f32 %v548
    %vm556 = vmor %vm554, %vm555
    %v557 = vsel %vm556, %v548, %v553
    %v558 = vrsqrt.pop %v407
    %v559 = vmul.f32 %v558, %v407
    %v560 = vmul.f32 %v559, %v558
    %v561 = vmul.f32 0.5, %v560
    %v562 = vsub.f32 1.5, %v561
    %v563 = vmul.f32 %v558, %v562
    %vm564 = vweird.f32 %v407
    %vm565 = vweird.f32 %v558
    %vm566 = vmor %vm564, %vm565
    %v567 = vsel %vm566, %v558, %v563
    %v568 = vmul.f32 %v297, %v417
    %v569 = vmul.f32 %v300, %v427
    %v570 = vmul.f32 %v303, %v437
    %v571 = vmul.f32 %v306, %v447
    %v572 = vmul.f32 %v309, %v457
    %v573 = vmul.f32 %v312, %v467
    %v574 = vmul.f32 %v315, %v477
    %v575 = vmul.f32 %v318, %v487
    %v576 = vmul.f32 %v321, %v497
    %v577 = vmul.f32 %v324, %v507
    %v578 = vmul.f32 %v327, %v517
    %v579 = vmul.f32 %v330, %v527
    %v580 = vmul.f32 %v333, %v537
    %v581 = vmul.f32 %v336, %v547
    %v582 = vmul.f32 %v339, %v557
    %v583 = vmul.f32 %v342, %v567
    %v584 = vmax.f32 %v568, 0.0
    %v585 = vmax.f32 %v569, 0.0
    %v586 = vmax.f32 %v570, 0.0
    %v587 = vmax.f32 %v571, 0.0
    %v588 = vmax.f32 %v572, 0.0
    %v589 = vmax.f32 %v573, 0.0
    %v590 = vmax.f32 %v574, 0.0
    %v591 = vmax.f32 %v575, 0.0
    %v592 = vmax.f32 %v576, 0.0
    %v593 = vmax.f32 %v577, 0.0
    %v594 = vmax.f32 %v578, 0.0
    %v595 = vmax.f32 %v579, 0.0
    %v596 = vmax.f32 %v580, 0.0
    %v597 = vmax.f32 %v581, 0.0
    %v598 = vmax.f32 %v582, 0.0
    %v599 = vmax.f32 %v583, 0.0
    %600 = vmatpush.msra.mxu0 %v599
    %601 = vmatpush.msra.mxu0 %v598
    %602 = vmatpush.msra.mxu0 %v597
    %603 = vmatpush.msra.mxu0 %v596
    %604 = vmatpush.msra.mxu0 %v595
    %605 = vmatpush.msra.mxu0 %v594
    %606 = vmatpush.msra.mxu0 %v593
    %607 = vmatpush.msra.mxu0 %v592
    %608 = vmatpush.msra.mxu0 %v591
    %609 = vmatpush.msra.mxu0 %v590
    %610 = vmatpush.msra.mxu0 %v589
    %611 = vmatpush.msra.mxu0 %v588
    %612 = vmatpush.msra.mxu0 %v587
    %613 = vmatpush.msra.mxu0 %v586
    %614 = vmatpush.msra.mxu0 %v585
    %615 = vmatpush.msra.mxu0 %v584
    %616 = vmatmul.f32.gmra.mxu0 %v81
    %v617 = vpop.f32.mrf.mxu0
    %v618 = vadd.f32 0.0, %v617
    %619 = vmatmul.f32.gmra.mxu0 %v82
    %v620 = vpop.f32.mrf.mxu0
    %v621 = vadd.f32 0.0, %v620
    %622 = vmatmul.f32.gmra.mxu0 %v83
    %v623 = vpop.f32.mrf.mxu0
    %v624 = vadd.f32 0.0, %v623
    %625 = vmatmul.f32.gmra.mxu0 %v84
    %v626 = vpop.f32.mrf.mxu0
    %v627 = vadd.f32 0.0, %v626
    %628 = vmatmul.f32.gmra.mxu0 %v85
    %v629 = vpop.f32.mrf.mxu0
    %v630 = vadd.f32 0.0, %v629
    %631 = vmatmul.f32.gmra.mxu0 %v86
    %v632 = vpop.f32.mrf.mxu0
    %v633 = vadd.f32 0.0, %v632
    %634 = vmatmul.f32.gmra.mxu0 %v87
    %v635 = vpop.f32.mrf.mxu0
    %v636 = vadd.f32 0.0, %v635
    %637 = vmatmul.f32.gmra.mxu0 %v88
    %v638 = vpop.f32.mrf.mxu0
    %v639 = vadd.f32 0.0, %v638
    %640 = vmatmul.f32.gmra.mxu0 %v89
    %v641 = vpop.f32.mrf.mxu0
    %v642 = vadd.f32 0.0, %v641
    %643 = vmatmul.f32.gmra.mxu0 %v90
    %v644 = vpop.f32.mrf.mxu0
    %v645 = vadd.f32 0.0, %v644
    %646 = vmatmul.f32.gmra.mxu0 %v91
    %v647 = vpop.f32.mrf.mxu0
    %v648 = vadd.f32 0.0, %v647
    %649 = vmatmul.f32.gmra.mxu0 %v92
    %v650 = vpop.f32.mrf.mxu0
    %v651 = vadd.f32 0.0, %v650
    %652 = vmatmul.f32.gmra.mxu0 %v93
    %v653 = vpop.f32.mrf.mxu0
    %v654 = vadd.f32 0.0, %v653
    %655 = vmatmul.f32.gmra.mxu0 %v94
    %v656 = vpop.f32.mrf.mxu0
    %v657 = vadd.f32 0.0, %v656
    %658 = vmatmul.f32.gmra.mxu0 %v95
    %v659 = vpop.f32.mrf.mxu0
    %v660 = vadd.f32 0.0, %v659
    %661 = vmatmul.f32.gmra.mxu0 %v96
    %v662 = vpop.f32.mrf.mxu0
    %v663 = vadd.f32 0.0, %v662
    %664 = vdwg.mxu0
    %s665 = scalar_lea.vmem [#allocation7], 256
    %v666 = vld [vmem:[%s665] sm:$0xff]
    %v667 = vld [vmem:[%s665 + $0x8] sm:$0xff]
    %v668 = vld [vmem:[%s665 + $0x10] sm:$0xff]
    %v669 = vld [vmem:[%s665 + $0x18] sm:$0xff]
    %v670 = vld [vmem:[%s665 + $0x20] sm:$0xff]
    %v671 = vld [vmem:[%s665 + $0x28] sm:$0xff]
    %v672 = vld [vmem:[%s665 + $0x30] sm:$0xff]
    %v673 = vld [vmem:[%s665 + $0x38] sm:$0xff]
    %v674 = vld [vmem:[%s665 + $0x40] sm:$0xff]
    %v675 = vld [vmem:[%s665 + $0x48] sm:$0xff]
    %v676 = vld [vmem:[%s665 + $0x50] sm:$0xff]
    %v677 = vld [vmem:[%s665 + $0x58] sm:$0xff]
    %v678 = vld [vmem:[%s665 + $0x60] sm:$0xff]
    %v679 = vld [vmem:[%s665 + $0x68] sm:$0xff]
    %v680 = vld [vmem:[%s665 + $0x70] sm:$0xff]
    %v681 = vld [vmem:[%s665 + $0x78] sm:$0xff]
    %v682 = vld [vmem:[%s665 + $0x80] sm:$0xff]
    %v683 = vld [vmem:[%s665 + $0x88] sm:$0xff]
    %v684 = vld [vmem:[%s665 + $0x90] sm:$0xff]
    %v685 = vld [vmem:[%s665 + $0x98] sm:$0xff]
    %v686 = vld [vmem:[%s665 + $0xa0] sm:$0xff]
    %v687 = vld [vmem:[%s665 + $0xa8] sm:$0xff]
    %v688 = vld [vmem:[%s665 + $0xb0] sm:$0xff]
    %v689 = vld [vmem:[%s665 + $0xb8] sm:$0xff]
    %v690 = vld [vmem:[%s665 + $0xc0] sm:$0xff]
    %v691 = vld [vmem:[%s665 + $0xc8] sm:$0xff]
    %v692 = vld [vmem:[%s665 + $0xd0] sm:$0xff]
    %v693 = vld [vmem:[%s665 + $0xd8] sm:$0xff]
    %v694 = vld [vmem:[%s665 + $0xe0] sm:$0xff]
    %v695 = vld [vmem:[%s665 + $0xe8] sm:$0xff]
    %v696 = vld [vmem:[%s665 + $0xf0] sm:$0xff]
    %v697 = vld [vmem:[%s665 + $0xf8] sm:$0xff]
    %s698 = scalar_lea.vmem [#allocation8], 1
    %v699 = vld [vmem:[%s698] sm:$0x1]
    %v701 = vperm.slane %v699, 0
    %703 = vmatpush.msra.mxu0 %v681
    %704 = vmatpush.msra.mxu0 %v680
    %705 = vmatpush.msra.mxu0 %v679
    %706 = vmatpush.msra.mxu0 %v678
    %707 = vmatpush.msra.mxu0 %v677
    %708 = vmatpush.msra.mxu0 %v676
    %709 = vmatpush.msra.mxu0 %v675
    %710 = vmatpush.msra.mxu0 %v674
    %711 = vmatpush.msra.mxu0 %v673
    %712 = vmatpush.msra.mxu0 %v672
    %713 = vmatpush.msra.mxu0 %v671
    %714 = vmatpush.msra.mxu0 %v670
    %715 = vmatpush.msra.mxu0 %v669
    %716 = vmatpush.msra.mxu0 %v668
    %717 = vmatpush.msra.mxu0 %v667
    %718 = vmatpush.msra.mxu0 %v666
    %719 = vmatmul.f32.gmra.mxu0 %v584
    %v720 = vpop.f32.mrf.mxu0
    %v721 = vadd.f32 %v701, %v720
    %722 = vmatmul.f32.gmra.mxu0 %v585
    %v723 = vpop.f32.mrf.mxu0
    %v724 = vadd.f32 %v701, %v723
    %725 = vmatmul.f32.gmra.mxu0 %v586
    %v726 = vpop.f32.mrf.mxu0
    %v727 = vadd.f32 %v701, %v726
    %728 = vmatmul.f32.gmra.mxu0 %v587
    %v729 = vpop.f32.mrf.mxu0
    %v730 = vadd.f32 %v701, %v729
    %731 = vmatmul.f32.gmra.mxu0 %v588
    %v732 = vpop.f32.mrf.mxu0
    %v733 = vadd.f32 %v701, %v732
    %734 = vmatmul.f32.gmra.mxu0 %v589
    %v735 = vpop.f32.mrf.mxu0
    %v736 = vadd.f32 %v701, %v735
    %737 = vmatmul.f32.gmra.mxu0 %v590
    %v738 = vpop.f32.mrf.mxu0
    %v739 = vadd.f32 %v701, %v738
    %740 = vmatmul.f32.gmra.mxu0 %v591
    %v741 = vpop.f32.mrf.mxu0
    %v742 = vadd.f32 %v701, %v741
    %743 = vmatmul.f32.gmra.mxu0 %v592
    %v744 = vpop.f32.mrf.mxu0
    %v745 = vadd.f32 %v701, %v744
    %746 = vmatmul.f32.gmra.mxu0 %v593
    %v747 = vpop.f32.mrf.mxu0
    %v748 = vadd.f32 %v701, %v747
    %749 = vmatmul.f32.gmra.mxu0 %v594
    %v750 = vpop.f32.mrf.mxu0
    %v751 = vadd.f32 %v701, %v750
    %752 = vmatmul.f32.gmra.mxu0 %v595
    %v753 = vpop.f32.mrf.mxu0
    %v754 = vadd.f32 %v701, %v753
    %755 = vmatmul.f32.gmra.mxu0 %v596
    %v756 = vpop.f32.mrf.mxu0
    %v757 = vadd.f32 %v701, %v756
    %758 = vmatmul.f32.gmra.mxu0 %v597
    %v759 = vpop.f32.mrf.mxu0
    %v760 = vadd.f32 %v701, %v759
    %761 = vmatmul.f32.gmra.mxu0 %v598
    %v762 = vpop.f32.mrf.mxu0
    %v763 = vadd.f32 %v701, %v762
    %764 = vmatmul.f32.gmra.mxu0 %v599
    %v765 = vpop.f32.mrf.mxu0
    %v766 = vadd.f32 %v701, %v765
    %767 = vdwg.mxu0
    %768 = vmatpush.msra.mxu0 %v697
    %769 = vmatpush.msra.mxu0 %v696
    %770 = vmatpush.msra.mxu0 %v695
    %771 = vmatpush.msra.mxu0 %v694
    %772 = vmatpush.msra.mxu0 %v693
    %773 = vmatpush.msra.mxu0 %v692
    %774 = vmatpush.msra.mxu0 %v691
    %775 = vmatpush.msra.mxu0 %v690
    %776 = vmatpush.msra.mxu0 %v689
    %777 = vmatpush.msra.mxu0 %v688
    %778 = vmatpush.msra.mxu0 %v687
    %779 = vmatpush.msra.mxu0 %v686
    %780 = vmatpush.msra.mxu0 %v685
    %781 = vmatpush.msra.mxu0 %v684
    %782 = vmatpush.msra.mxu0 %v683
    %783 = vmatpush.msra.mxu0 %v682
    %784 = vmatmul.f32.gmra.mxu0 %v618
    %v785 = vpop.f32.mrf.mxu0
    %v786 = vadd.f32 %v721, %v785
    %787 = vmatmul.f32.gmra.mxu0 %v621
    %v788 = vpop.f32.mrf.mxu0
    %v789 = vadd.f32 %v724, %v788
    %790 = vmatmul.f32.gmra.mxu0 %v624
    %v791 = vpop.f32.mrf.mxu0
    %v792 = vadd.f32 %v727, %v791
    %793 = vmatmul.f32.gmra.mxu0 %v627
    %v794 = vpop.f32.mrf.mxu0
    %v795 = vadd.f32 %v730, %v794
    %796 = vmatmul.f32.gmra.mxu0 %v630
    %v797 = vpop.f32.mrf.mxu0
    %v798 = vadd.f32 %v733, %v797
    %799 = vmatmul.f32.gmra.mxu0 %v633
    %v800 = vpop.f32.mrf.mxu0
    %v801 = vadd.f32 %v736, %v800
    %802 = vmatmul.f32.gmra.mxu0 %v636
    %v803 = vpop.f32.mrf.mxu0
    %v804 = vadd.f32 %v739, %v803
    %805 = vmatmul.f32.gmra.mxu0 %v639
    %v806 = vpop.f32.mrf.mxu0
    %v807 = vadd.f32 %v742, %v806
    %808 = vmatmul.f32.gmra.mxu0 %v642
    %v809 = vpop.f32.mrf.mxu0
    %v810 = vadd.f32 %v745, %v809
    %811 = vmatmul.f32.gmra.mxu0 %v645
    %v812 = vpop.f32.mrf.mxu0
    %v813 = vadd.f32 %v748, %v812
    %814 = vmatmul.f32.gmra.mxu0 %v648
    %v815 = vpop.f32.mrf.mxu0
    %v816 = vadd.f32 %v751, %v815
    %817 = vmatmul.f32.gmra.mxu0 %v651
    %v818 = vpop.f32.mrf.mxu0
    %v819 = vadd.f32 %v754, %v818
    %820 = vmatmul.f32.gmra.mxu0 %v654
    %v821 = vpop.f32.mrf.mxu0
    %v822 = vadd.f32 %v757, %v821
    %823 = vmatmul.f32.gmra.mxu0 %v657
    %v824 = vpop.f32.mrf.mxu0
    %v825 = vadd.f32 %v760, %v824
    %826 = vmatmul.f32.gmra.mxu0 %v660
    %v827 = vpop.f32.mrf.mxu0
    %v828 = vadd.f32 %v763, %v827
    %829 = vmatmul.f32.gmra.mxu0 %v663
    %v830 = vpop.f32.mrf.mxu0
    %v831 = vadd.f32 %v766, %v830
    %832 = vdwg.mxu0
    %v833 = vmul.f32 %v786, %v786
    %v834 = vmul.f32 %v789, %v789
    %v835 = vmul.f32 %v792, %v792
    %v836 = vmul.f32 %v795, %v795
    %v837 = vmul.f32 %v798, %v798
    %v838 = vmul.f32 %v801, %v801
    %v839 = vmul.f32 %v804, %v804
    %v840 = vmul.f32 %v807, %v807
    %v841 = vmul.f32 %v810, %v810
    %v842 = vmul.f32 %v813, %v813
    %v843 = vmul.f32 %v816, %v816
    %v844 = vmul.f32 %v819, %v819
    %v845 = vmul.f32 %v822, %v822
    %v846 = vmul.f32 %v825, %v825
    %v847 = vmul.f32 %v828, %v828
    %v848 = vmul.f32 %v831, %v831
    %849 = vadd.xlane.f32.xlu0 %v833
    %v850 = vpop.xlane.xlu0 %849
    %851 = vadd.xlane.f32.xlu0 %v834
    %v852 = vpop.xlane.xlu0 %851
    %853 = vadd.xlane.f32.xlu0 %v835
    %v854 = vpop.xlane.xlu0 %853
    %855 = vadd.xlane.f32.xlu0 %v836
    %v856 = vpop.xlane.xlu0 %855
    %857 = vadd.xlane.f32.xlu0 %v837
    %v858 = vpop.xlane.xlu0 %857
    %859 = vadd.xlane.f32.xlu0 %v838
    %v860 = vpop.xlane.xlu0 %859
    %861 = vadd.xlane.f32.xlu0 %v839
    %v862 = vpop.xlane.xlu0 %861
    %863 = vadd.xlane.f32.xlu0 %v840
    %v864 = vpop.xlane.xlu0 %863
    %865 = vadd.xlane.f32.xlu0 %v841
    %v866 = vpop.xlane.xlu0 %865
    %867 = vadd.xlane.f32.xlu0 %v842
    %v868 = vpop.xlane.xlu0 %867
    %869 = vadd.xlane.f32.xlu0 %v843
    %v870 = vpop.xlane.xlu0 %869
    %871 = vadd.xlane.f32.xlu0 %v844
    %v872 = vpop.xlane.xlu0 %871
    %873 = vadd.xlane.f32.xlu0 %v845
    %v874 = vpop.xlane.xlu0 %873
    %875 = vadd.xlane.f32.xlu0 %v846
    %v876 = vpop.xlane.xlu0 %875
    %877 = vadd.xlane.f32.xlu0 %v847
    %v878 = vpop.xlane.xlu0 %877
    %879 = vadd.xlane.f32.xlu0 %v848
    %v880 = vpop.xlane.xlu0 %879
    %v881 = vmax.f32 %v850, 1e-24
    %v882 = vmax.f32 %v852, 1e-24
    %v883 = vmax.f32 %v854, 1e-24
    %v884 = vmax.f32 %v856, 1e-24
    %v885 = vmax.f32 %v858, 1e-24
    %v886 = vmax.f32 %v860, 1e-24
    %v887 = vmax.f32 %v862, 1e-24
    %v888 = vmax.f32 %v864, 1e-24
    %v889 = vmax.f32 %v866, 1e-24
    %v890 = vmax.f32 %v868, 1e-24
    %v891 = vmax.f32 %v870, 1e-24
    %v892 = vmax.f32 %v872, 1e-24
    %v893 = vmax.f32 %v874, 1e-24
    %v894 = vmax.f32 %v876, 1e-24
    %v895 = vmax.f32 %v878, 1e-24
    %v896 = vmax.f32 %v880, 1e-24
    %v897 = vrsqrt.pop %v881
    %v898 = vmul.f32 %v897, %v881
    %v899 = vmul.f32 %v898, %v897
    %v900 = vmul.f32 0.5, %v899
    %v901 = vsub.f32 1.5, %v900
    %v902 = vmul.f32 %v897, %v901
    %vm903 = vweird.f32 %v881
    %vm904 = vweird.f32 %v897
    %vm905 = vmor %vm903, %vm904
    %v906 = vsel %vm905, %v897, %v902
    %v907 = vrsqrt.pop %v882
    %v908 = vmul.f32 %v907, %v882
    %v909 = vmul.f32 %v908, %v907
    %v910 = vmul.f32 0.5, %v909
    %v911 = vsub.f32 1.5, %v910
    %v912 = vmul.f32 %v907, %v911
    %vm913 = vweird.f32 %v882
    %vm914 = vweird.f32 %v907
    %vm915 = vmor %vm913, %vm914
    %v916 = vsel %vm915, %v907, %v912
    %v917 = vrsqrt.pop %v883
    %v918 = vmul.f32 %v917, %v883
    %v919 = vmul.f32 %v918, %v917
    %v920 = vmul.f32 0.5, %v919
    %v921 = vsub.f32 1.5, %v920
    %v922 = vmul.f32 %v917, %v921
    %vm923 = vweird.f32 %v883
    %vm924 = vweird.f32 %v917
    %vm925 = vmor %vm923, %vm924
    %v926 = vsel %vm925, %v917, %v922
    %v927 = vrsqrt.pop %v884
    %v928 = vmul.f32 %v927, %v884
    %v929 = vmul.f32 %v928, %v927
    %v930 = vmul.f32 0.5, %v929
    %v931 = vsub.f32 1.5, %v930
    %v932 = vmul.f32 %v927, %v931
    %vm933 = vweird.f32 %v884
    %vm934 = vweird.f32 %v927
    %vm935 = vmor %vm933, %vm934
    %v936 = vsel %vm935, %v927, %v932
    %v937 = vrsqrt.pop %v885
    %v938 = vmul.f32 %v937, %v885
    %v939 = vmul.f32 %v938, %v937
    %v940 = vmul.f32 0.5, %v939
    %v941 = vsub.f32 1.5, %v940
    %v942 = vmul.f32 %v937, %v941
    %vm943 = vweird.f32 %v885
    %vm944 = vweird.f32 %v937
    %vm945 = vmor %vm943, %vm944
    %v946 = vsel %vm945, %v937, %v942
    %v947 = vrsqrt.pop %v886
    %v948 = vmul.f32 %v947, %v886
    %v949 = vmul.f32 %v948, %v947
    %v950 = vmul.f32 0.5, %v949
    %v951 = vsub.f32 1.5, %v950
    %v952 = vmul.f32 %v947, %v951
    %vm953 = vweird.f32 %v886
    %vm954 = vweird.f32 %v947
    %vm955 = vmor %vm953, %vm954
    %v956 = vsel %vm955, %v947, %v952
    %v957 = vrsqrt.pop %v887
    %v958 = vmul.f32 %v957, %v887
    %v959 = vmul.f32 %v958, %v957
    %v960 = vmul.f32 0.5, %v959
    %v961 = vsub.f32 1.5, %v960
    %v962 = vmul.f32 %v957, %v961
    %vm963 = vweird.f32 %v887
    %vm964 = vweird.f32 %v957
    %vm965 = vmor %vm963, %vm964
    %v966 = vsel %vm965, %v957, %v962
    %v967 = vrsqrt.pop %v888
    %v968 = vmul.f32 %v967, %v888
    %v969 = vmul.f32 %v968, %v967
    %v970 = vmul.f32 0.5, %v969
    %v971 = vsub.f32 1.5, %v970
    %v972 = vmul.f32 %v967, %v971
    %vm973 = vweird.f32 %v888
    %vm974 = vweird.f32 %v967
    %vm975 = vmor %vm973, %vm974
    %v976 = vsel %vm975, %v967, %v972
    %v977 = vrsqrt.pop %v889
    %v978 = vmul.f32 %v977, %v889
    %v979 = vmul.f32 %v978, %v977
    %v980 = vmul.f32 0.5, %v979
    %v981 = vsub.f32 1.5, %v980
    %v982 = vmul.f32 %v977, %v981
    %vm983 = vweird.f32 %v889
    %vm984 = vweird.f32 %v977
    %vm985 = vmor %vm983, %vm984
    %v986 = vsel %vm985, %v977, %v982
    %v987 = vrsqrt.pop %v890
    %v988 = vmul.f32 %v987, %v890
    %v989 = vmul.f32 %v988, %v987
    %v990 = vmul.f32 0.5, %v989
    %v991 = vsub.f32 1.5, %v990
    %v992 = vmul.f32 %v987, %v991
    %vm993 = vweird.f32 %v890
    %vm994 = vweird.f32 %v987
    %vm995 = vmor %vm993, %vm994
    %v996 = vsel %vm995, %v987, %v992
    %v997 = vrsqrt.pop %v891
    %v998 = vmul.f32 %v997, %v891
    %v999 = vmul.f32 %v998, %v997
    %v1000 = vmul.f32 0.5, %v999
    %v1001 = vsub.f32 1.5, %v1000
    %v1002 = vmul.f32 %v997, %v1001
    %vm1003 = vweird.f32 %v891
    %vm1004 = vweird.f32 %v997
    %vm1005 = vmor %vm1003, %vm1004
    %v1006 = vsel %vm1005, %v997, %v1002
    %v1007 = vrsqrt.pop %v892
    %v1008 = vmul.f32 %v1007, %v892
    %v1009 = vmul.f32 %v1008, %v1007
    %v1010 = vmul.f32 0.5, %v1009
    %v1011 = vsub.f32 1.5, %v1010
    %v1012 = vmul.f32 %v1007, %v1011
    %vm1013 = vweird.f32 %v892
    %vm1014 = vweird.f32 %v1007
    %vm1015 = vmor %vm1013, %vm1014
    %v1016 = vsel %vm1015, %v1007, %v1012
    %v1017 = vrsqrt.pop %v893
    %v1018 = vmul.f32 %v1017, %v893
    %v1019 = vmul.f32 %v1018, %v1017
    %v1020 = vmul.f32 0.5, %v1019
    %v1021 = vsub.f32 1.5, %v1020
    %v1022 = vmul.f32 %v1017, %v1021
    %vm1023 = vweird.f32 %v893
    %vm1024 = vweird.f32 %v1017
    %vm1025 = vmor %vm1023, %vm1024
    %v1026 = vsel %vm1025, %v1017, %v1022
    %v1027 = vrsqrt.pop %v894
    %v1028 = vmul.f32 %v1027, %v894
    %v1029 = vmul.f32 %v1028, %v1027
    %v1030 = vmul.f32 0.5, %v1029
    %v1031 = vsub.f32 1.5, %v1030
    %v1032 = vmul.f32 %v1027, %v1031
    %vm1033 = vweird.f32 %v894
    %vm1034 = vweird.f32 %v1027
    %vm1035 = vmor %vm1033, %vm1034
    %v1036 = vsel %vm1035, %v1027, %v1032
    %v1037 = vrsqrt.pop %v895
    %v1038 = vmul.f32 %v1037, %v895
    %v1039 = vmul.f32 %v1038, %v1037
    %v1040 = vmul.f32 0.5, %v1039
    %v1041 = vsub.f32 1.5, %v1040
    %v1042 = vmul.f32 %v1037, %v1041
    %vm1043 = vweird.f32 %v895
    %vm1044 = vweird.f32 %v1037
    %vm1045 = vmor %vm1043, %vm1044
    %v1046 = vsel %vm1045, %v1037, %v1042
    %v1047 = vrsqrt.pop %v896
    %v1048 = vmul.f32 %v1047, %v896
    %v1049 = vmul.f32 %v1048, %v1047
    %v1050 = vmul.f32 0.5, %v1049
    %v1051 = vsub.f32 1.5, %v1050
    %v1052 = vmul.f32 %v1047, %v1051
    %vm1053 = vweird.f32 %v896
    %vm1054 = vweird.f32 %v1047
    %vm1055 = vmor %vm1053, %vm1054
    %v1056 = vsel %vm1055, %v1047, %v1052
    %v1057 = vmul.f32 %v786, %v906
    %v1058 = vmul.f32 %v789, %v916
    %v1059 = vmul.f32 %v792, %v926
    %v1060 = vmul.f32 %v795, %v936
    %v1061 = vmul.f32 %v798, %v946
    %v1062 = vmul.f32 %v801, %v956
    %v1063 = vmul.f32 %v804, %v966
    %v1064 = vmul.f32 %v807, %v976
    %v1065 = vmul.f32 %v810, %v986
    %v1066 = vmul.f32 %v813, %v996
    %v1067 = vmul.f32 %v816, %v1006
    %v1068 = vmul.f32 %v819, %v1016
    %v1069 = vmul.f32 %v822, %v1026
    %v1070 = vmul.f32 %v825, %v1036
    %v1071 = vmul.f32 %v828, %v1046
    %v1072 = vmul.f32 %v831, %v1056
    %v1073 = vmax.f32 %v1057, 0.0
    %v1074 = vmax.f32 %v1058, 0.0
    %v1075 = vmax.f32 %v1059, 0.0
    %v1076 = vmax.f32 %v1060, 0.0
    %v1077 = vmax.f32 %v1061, 0.0
    %v1078 = vmax.f32 %v1062, 0.0
    %v1079 = vmax.f32 %v1063, 0.0
    %v1080 = vmax.f32 %v1064, 0.0
    %v1081 = vmax.f32 %v1065, 0.0
    %v1082 = vmax.f32 %v1066, 0.0
    %v1083 = vmax.f32 %v1067, 0.0
    %v1084 = vmax.f32 %v1068, 0.0
    %v1085 = vmax.f32 %v1069, 0.0
    %v1086 = vmax.f32 %v1070, 0.0
    %v1087 = vmax.f32 %v1071, 0.0
    %v1088 = vmax.f32 %v1072, 0.0
    %v1089 = vadd.f32 %v1073, %v584
    %v1090 = vadd.f32 %v1074, %v585
    %v1091 = vadd.f32 %v1075, %v586
    %v1092 = vadd.f32 %v1076, %v587
    %v1093 = vadd.f32 %v1077, %v588
    %v1094 = vadd.f32 %v1078, %v589
    %v1095 = vadd.f32 %v1079, %v590
    %v1096 = vadd.f32 %v1080, %v591
    %v1097 = vadd.f32 %v1081, %v592
    %v1098 = vadd.f32 %v1082, %v593
    %v1099 = vadd.f32 %v1083, %v594
    %v1100 = vadd.f32 %v1084, %v595
    %v1101 = vadd.f32 %v1085, %v596
    %v1102 = vadd.f32 %v1086, %v597
    %v1103 = vadd.f32 %v1087, %v598
    %v1104 = vadd.f32 %v1088, %v599
    %1105 = vmatpush.msra.mxu0 %v1104
    %1106 = vmatpush.msra.mxu0 %v1103
    %1107 = vmatpush.msra.mxu0 %v1102
    %1108 = vmatpush.msra.mxu0 %v1101
    %1109 = vmatpush.msra.mxu0 %v1100
    %1110 = vmatpush.msra.mxu0 %v1099
    %1111 = vmatpush.msra.mxu0 %v1098
    %1112 = vmatpush.msra.mxu0 %v1097
    %1113 = vmatpush.msra.mxu0 %v1096
    %1114 = vmatpush.msra.mxu0 %v1095
    %1115 = vmatpush.msra.mxu0 %v1094
    %1116 = vmatpush.msra.mxu0 %v1093
    %1117 = vmatpush.msra.mxu0 %v1092
    %1118 = vmatpush.msra.mxu0 %v1091
    %1119 = vmatpush.msra.mxu0 %v1090
    %1120 = vmatpush.msra.mxu0 %v1089
    %1121 = vmatmul.f32.gmra.mxu0 %v81
    %v1122 = vpop.f32.mrf.mxu0
    %v1123 = vadd.f32 0.0, %v1122
    %1124 = vmatmul.f32.gmra.mxu0 %v82
    %v1125 = vpop.f32.mrf.mxu0
    %v1126 = vadd.f32 0.0, %v1125
    %1127 = vmatmul.f32.gmra.mxu0 %v83
    %v1128 = vpop.f32.mrf.mxu0
    %v1129 = vadd.f32 0.0, %v1128
    %1130 = vmatmul.f32.gmra.mxu0 %v84
    %v1131 = vpop.f32.mrf.mxu0
    %v1132 = vadd.f32 0.0, %v1131
    %1133 = vmatmul.f32.gmra.mxu0 %v85
    %v1134 = vpop.f32.mrf.mxu0
    %v1135 = vadd.f32 0.0, %v1134
    %1136 = vmatmul.f32.gmra.mxu0 %v86
    %v1137 = vpop.f32.mrf.mxu0
    %v1138 = vadd.f32 0.0, %v1137
    %1139 = vmatmul.f32.gmra.mxu0 %v87
    %v1140 = vpop.f32.mrf.mxu0
    %v1141 = vadd.f32 0.0, %v1140
    %1142 = vmatmul.f32.gmra.mxu0 %v88
    %v1143 = vpop.f32.mrf.mxu0
    %v1144 = vadd.f32 0.0, %v1143
    %1145 = vmatmul.f32.gmra.mxu0 %v89
    %v1146 = vpop.f32.mrf.mxu0
    %v1147 = vadd.f32 0.0, %v1146
    %1148 = vmatmul.f32.gmra.mxu0 %v90
    %v1149 = vpop.f32.mrf.mxu0
    %v1150 = vadd.f32 0.0, %v1149
    %1151 = vmatmul.f32.gmra.mxu0 %v91
    %v1152 = vpop.f32.mrf.mxu0
    %v1153 = vadd.f32 0.0, %v1152
    %1154 = vmatmul.f32.gmra.mxu0 %v92
    %v1155 = vpop.f32.mrf.mxu0
    %v1156 = vadd.f32 0.0, %v1155
    %1157 = vmatmul.f32.gmra.mxu0 %v93
    %v1158 = vpop.f32.mrf.mxu0
    %v1159 = vadd.f32 0.0, %v1158
    %1160 = vmatmul.f32.gmra.mxu0 %v94
    %v1161 = vpop.f32.mrf.mxu0
    %v1162 = vadd.f32 0.0, %v1161
    %1163 = vmatmul.f32.gmra.mxu0 %v95
    %v1164 = vpop.f32.mrf.mxu0
    %v1165 = vadd.f32 0.0, %v1164
    %1166 = vmatmul.f32.gmra.mxu0 %v96
    %v1167 = vpop.f32.mrf.mxu0
    %v1168 = vadd.f32 0.0, %v1167
    %1169 = vdwg.mxu0
    %s1170 = scalar_lea.vmem [#allocation7], 512
    %v1171 = vld [vmem:[%s1170] sm:$0xff]
    %v1172 = vld [vmem:[%s1170 + $0x8] sm:$0xff]
    %v1173 = vld [vmem:[%s1170 + $0x10] sm:$0xff]
    %v1174 = vld [vmem:[%s1170 + $0x18] sm:$0xff]
    %v1175 = vld [vmem:[%s1170 + $0x20] sm:$0xff]
    %v1176 = vld [vmem:[%s1170 + $0x28] sm:$0xff]
    %v1177 = vld [vmem:[%s1170 + $0x30] sm:$0xff]
    %v1178 = vld [vmem:[%s1170 + $0x38] sm:$0xff]
    %v1179 = vld [vmem:[%s1170 + $0x40] sm:$0xff]
    %v1180 = vld [vmem:[%s1170 + $0x48] sm:$0xff]
    %v1181 = vld [vmem:[%s1170 + $0x50] sm:$0xff]
    %v1182 = vld [vmem:[%s1170 + $0x58] sm:$0xff]
    %v1183 = vld [vmem:[%s1170 + $0x60] sm:$0xff]
    %v1184 = vld [vmem:[%s1170 + $0x68] sm:$0xff]
    %v1185 = vld [vmem:[%s1170 + $0x70] sm:$0xff]
    %v1186 = vld [vmem:[%s1170 + $0x78] sm:$0xff]
    %v1187 = vld [vmem:[%s1170 + $0x80] sm:$0xff]
    %v1188 = vld [vmem:[%s1170 + $0x88] sm:$0xff]
    %v1189 = vld [vmem:[%s1170 + $0x90] sm:$0xff]
    %v1190 = vld [vmem:[%s1170 + $0x98] sm:$0xff]
    %v1191 = vld [vmem:[%s1170 + $0xa0] sm:$0xff]
    %v1192 = vld [vmem:[%s1170 + $0xa8] sm:$0xff]
    %v1193 = vld [vmem:[%s1170 + $0xb0] sm:$0xff]
    %v1194 = vld [vmem:[%s1170 + $0xb8] sm:$0xff]
    %v1195 = vld [vmem:[%s1170 + $0xc0] sm:$0xff]
    %v1196 = vld [vmem:[%s1170 + $0xc8] sm:$0xff]
    %v1197 = vld [vmem:[%s1170 + $0xd0] sm:$0xff]
    %v1198 = vld [vmem:[%s1170 + $0xd8] sm:$0xff]
    %v1199 = vld [vmem:[%s1170 + $0xe0] sm:$0xff]
    %v1200 = vld [vmem:[%s1170 + $0xe8] sm:$0xff]
    %v1201 = vld [vmem:[%s1170 + $0xf0] sm:$0xff]
    %v1202 = vld [vmem:[%s1170 + $0xf8] sm:$0xff]
    %s1203 = scalar_lea.vmem [#allocation8], 2
    %v1204 = vld [vmem:[%s1203] sm:$0x1]
    %v1206 = vperm.slane %v1204, 0
    %1208 = vmatpush.msra.mxu0 %v1186
    %1209 = vmatpush.msra.mxu0 %v1185
    %1210 = vmatpush.msra.mxu0 %v1184
    %1211 = vmatpush.msra.mxu0 %v1183
    %1212 = vmatpush.msra.mxu0 %v1182
    %1213 = vmatpush.msra.mxu0 %v1181
    %1214 = vmatpush.msra.mxu0 %v1180
    %1215 = vmatpush.msra.mxu0 %v1179
    %1216 = vmatpush.msra.mxu0 %v1178
    %1217 = vmatpush.msra.mxu0 %v1177
    %1218 = vmatpush.msra.mxu0 %v1176
    %1219 = vmatpush.msra.mxu0 %v1175
    %1220 = vmatpush.msra.mxu0 %v1174
    %1221 = vmatpush.msra.mxu0 %v1173
    %1222 = vmatpush.msra.mxu0 %v1172
    %1223 = vmatpush.msra.mxu0 %v1171
    %1224 = vmatmul.f32.gmra.mxu0 %v1089
    %v1225 = vpop.f32.mrf.mxu0
    %v1226 = vadd.f32 %v1206, %v1225
    %1227 = vmatmul.f32.gmra.mxu0 %v1090
    %v1228 = vpop.f32.mrf.mxu0
    %v1229 = vadd.f32 %v1206, %v1228
    %1230 = vmatmul.f32.gmra.mxu0 %v1091
    %v1231 = vpop.f32.mrf.mxu0
    %v1232 = vadd.f32 %v1206, %v1231
    %1233 = vmatmul.f32.gmra.mxu0 %v1092
    %v1234 = vpop.f32.mrf.mxu0
    %v1235 = vadd.f32 %v1206, %v1234
    %1236 = vmatmul.f32.gmra.mxu0 %v1093
    %v1237 = vpop.f32.mrf.mxu0
    %v1238 = vadd.f32 %v1206, %v1237
    %1239 = vmatmul.f32.gmra.mxu0 %v1094
    %v1240 = vpop.f32.mrf.mxu0
    %v1241 = vadd.f32 %v1206, %v1240
    %1242 = vmatmul.f32.gmra.mxu0 %v1095
    %v1243 = vpop.f32.mrf.mxu0
    %v1244 = vadd.f32 %v1206, %v1243
    %1245 = vmatmul.f32.gmra.mxu0 %v1096
    %v1246 = vpop.f32.mrf.mxu0
    %v1247 = vadd.f32 %v1206, %v1246
    %1248 = vmatmul.f32.gmra.mxu0 %v1097
    %v1249 = vpop.f32.mrf.mxu0
    %v1250 = vadd.f32 %v1206, %v1249
    %1251 = vmatmul.f32.gmra.mxu0 %v1098
    %v1252 = vpop.f32.mrf.mxu0
    %v1253 = vadd.f32 %v1206, %v1252
    %1254 = vmatmul.f32.gmra.mxu0 %v1099
    %v1255 = vpop.f32.mrf.mxu0
    %v1256 = vadd.f32 %v1206, %v1255
    %1257 = vmatmul.f32.gmra.mxu0 %v1100
    %v1258 = vpop.f32.mrf.mxu0
    %v1259 = vadd.f32 %v1206, %v1258
    %1260 = vmatmul.f32.gmra.mxu0 %v1101
    %v1261 = vpop.f32.mrf.mxu0
    %v1262 = vadd.f32 %v1206, %v1261
    %1263 = vmatmul.f32.gmra.mxu0 %v1102
    %v1264 = vpop.f32.mrf.mxu0
    %v1265 = vadd.f32 %v1206, %v1264
    %1266 = vmatmul.f32.gmra.mxu0 %v1103
    %v1267 = vpop.f32.mrf.mxu0
    %v1268 = vadd.f32 %v1206, %v1267
    %1269 = vmatmul.f32.gmra.mxu0 %v1104
    %v1270 = vpop.f32.mrf.mxu0
    %v1271 = vadd.f32 %v1206, %v1270
    %1272 = vdwg.mxu0
    %1273 = vmatpush.msra.mxu0 %v1202
    %1274 = vmatpush.msra.mxu0 %v1201
    %1275 = vmatpush.msra.mxu0 %v1200
    %1276 = vmatpush.msra.mxu0 %v1199
    %1277 = vmatpush.msra.mxu0 %v1198
    %1278 = vmatpush.msra.mxu0 %v1197
    %1279 = vmatpush.msra.mxu0 %v1196
    %1280 = vmatpush.msra.mxu0 %v1195
    %1281 = vmatpush.msra.mxu0 %v1194
    %1282 = vmatpush.msra.mxu0 %v1193
    %1283 = vmatpush.msra.mxu0 %v1192
    %1284 = vmatpush.msra.mxu0 %v1191
    %1285 = vmatpush.msra.mxu0 %v1190
    %1286 = vmatpush.msra.mxu0 %v1189
    %1287 = vmatpush.msra.mxu0 %v1188
    %1288 = vmatpush.msra.mxu0 %v1187
    %1289 = vmatmul.f32.gmra.mxu0 %v1123
    %v1290 = vpop.f32.mrf.mxu0
    %v1291 = vadd.f32 %v1226, %v1290
    %1292 = vmatmul.f32.gmra.mxu0 %v1126
    %v1293 = vpop.f32.mrf.mxu0
    %v1294 = vadd.f32 %v1229, %v1293
    %1295 = vmatmul.f32.gmra.mxu0 %v1129
    %v1296 = vpop.f32.mrf.mxu0
    %v1297 = vadd.f32 %v1232, %v1296
    %1298 = vmatmul.f32.gmra.mxu0 %v1132
    %v1299 = vpop.f32.mrf.mxu0
    %v1300 = vadd.f32 %v1235, %v1299
    %1301 = vmatmul.f32.gmra.mxu0 %v1135
    %v1302 = vpop.f32.mrf.mxu0
    %v1303 = vadd.f32 %v1238, %v1302
    %1304 = vmatmul.f32.gmra.mxu0 %v1138
    %v1305 = vpop.f32.mrf.mxu0
    %v1306 = vadd.f32 %v1241, %v1305
    %1307 = vmatmul.f32.gmra.mxu0 %v1141
    %v1308 = vpop.f32.mrf.mxu0
    %v1309 = vadd.f32 %v1244, %v1308
    %1310 = vmatmul.f32.gmra.mxu0 %v1144
    %v1311 = vpop.f32.mrf.mxu0
    %v1312 = vadd.f32 %v1247, %v1311
    %1313 = vmatmul.f32.gmra.mxu0 %v1147
    %v1314 = vpop.f32.mrf.mxu0
    %v1315 = vadd.f32 %v1250, %v1314
    %1316 = vmatmul.f32.gmra.mxu0 %v1150
    %v1317 = vpop.f32.mrf.mxu0
    %v1318 = vadd.f32 %v1253, %v1317
    %1319 = vmatmul.f32.gmra.mxu0 %v1153
    %v1320 = vpop.f32.mrf.mxu0
    %v1321 = vadd.f32 %v1256, %v1320
    %1322 = vmatmul.f32.gmra.mxu0 %v1156
    %v1323 = vpop.f32.mrf.mxu0
    %v1324 = vadd.f32 %v1259, %v1323
    %1325 = vmatmul.f32.gmra.mxu0 %v1159
    %v1326 = vpop.f32.mrf.mxu0
    %v1327 = vadd.f32 %v1262, %v1326
    %1328 = vmatmul.f32.gmra.mxu0 %v1162
    %v1329 = vpop.f32.mrf.mxu0
    %v1330 = vadd.f32 %v1265, %v1329
    %1331 = vmatmul.f32.gmra.mxu0 %v1165
    %v1332 = vpop.f32.mrf.mxu0
    %v1333 = vadd.f32 %v1268, %v1332
    %1334 = vmatmul.f32.gmra.mxu0 %v1168
    %v1335 = vpop.f32.mrf.mxu0
    %v1336 = vadd.f32 %v1271, %v1335
    %1337 = vdwg.mxu0
    %v1338 = vmul.f32 %v1291, %v1291
    %v1339 = vmul.f32 %v1294, %v1294
    %v1340 = vmul.f32 %v1297, %v1297
    %v1341 = vmul.f32 %v1300, %v1300
    %v1342 = vmul.f32 %v1303, %v1303
    %v1343 = vmul.f32 %v1306, %v1306
    %v1344 = vmul.f32 %v1309, %v1309
    %v1345 = vmul.f32 %v1312, %v1312
    %v1346 = vmul.f32 %v1315, %v1315
    %v1347 = vmul.f32 %v1318, %v1318
    %v1348 = vmul.f32 %v1321, %v1321
    %v1349 = vmul.f32 %v1324, %v1324
    %v1350 = vmul.f32 %v1327, %v1327
    %v1351 = vmul.f32 %v1330, %v1330
    %v1352 = vmul.f32 %v1333, %v1333
    %v1353 = vmul.f32 %v1336, %v1336
    %1354 = vadd.xlane.f32.xlu0 %v1338
    %v1355 = vpop.xlane.xlu0 %1354
    %1356 = vadd.xlane.f32.xlu0 %v1339
    %v1357 = vpop.xlane.xlu0 %1356
    %1358 = vadd.xlane.f32.xlu0 %v1340
    %v1359 = vpop.xlane.xlu0 %1358
    %1360 = vadd.xlane.f32.xlu0 %v1341
    %v1361 = vpop.xlane.xlu0 %1360
    %1362 = vadd.xlane.f32.xlu0 %v1342
    %v1363 = vpop.xlane.xlu0 %1362
    %1364 = vadd.xlane.f32.xlu0 %v1343
    %v1365 = vpop.xlane.xlu0 %1364
    %1366 = vadd.xlane.f32.xlu0 %v1344
    %v1367 = vpop.xlane.xlu0 %1366
    %1368 = vadd.xlane.f32.xlu0 %v1345
    %v1369 = vpop.xlane.xlu0 %1368
    %1370 = vadd.xlane.f32.xlu0 %v1346
    %v1371 = vpop.xlane.xlu0 %1370
    %1372 = vadd.xlane.f32.xlu0 %v1347
    %v1373 = vpop.xlane.xlu0 %1372
    %1374 = vadd.xlane.f32.xlu0 %v1348
    %v1375 = vpop.xlane.xlu0 %1374
    %1376 = vadd.xlane.f32.xlu0 %v1349
    %v1377 = vpop.xlane.xlu0 %1376
    %1378 = vadd.xlane.f32.xlu0 %v1350
    %v1379 = vpop.xlane.xlu0 %1378
    %1380 = vadd.xlane.f32.xlu0 %v1351
    %v1381 = vpop.xlane.xlu0 %1380
    %1382 = vadd.xlane.f32.xlu0 %v1352
    %v1383 = vpop.xlane.xlu0 %1382
    %1384 = vadd.xlane.f32.xlu0 %v1353
    %v1385 = vpop.xlane.xlu0 %1384
    %v1386 = vmax.f32 %v1355, 1e-24
    %v1387 = vmax.f32 %v1357, 1e-24
    %v1388 = vmax.f32 %v1359, 1e-24
    %v1389 = vmax.f32 %v1361, 1e-24
    %v1390 = vmax.f32 %v1363, 1e-24
    %v1391 = vmax.f32 %v1365, 1e-24
    %v1392 = vmax.f32 %v1367, 1e-24
    %v1393 = vmax.f32 %v1369, 1e-24
    %v1394 = vmax.f32 %v1371, 1e-24
    %v1395 = vmax.f32 %v1373, 1e-24
    %v1396 = vmax.f32 %v1375, 1e-24
    %v1397 = vmax.f32 %v1377, 1e-24
    %v1398 = vmax.f32 %v1379, 1e-24
    %v1399 = vmax.f32 %v1381, 1e-24
    %v1400 = vmax.f32 %v1383, 1e-24
    %v1401 = vmax.f32 %v1385, 1e-24
    %v1402 = vrsqrt.pop %v1386
    %v1403 = vmul.f32 %v1402, %v1386
    %v1404 = vmul.f32 %v1403, %v1402
    %v1405 = vmul.f32 0.5, %v1404
    %v1406 = vsub.f32 1.5, %v1405
    %v1407 = vmul.f32 %v1402, %v1406
    %vm1408 = vweird.f32 %v1386
    %vm1409 = vweird.f32 %v1402
    %vm1410 = vmor %vm1408, %vm1409
    %v1411 = vsel %vm1410, %v1402, %v1407
    %v1412 = vrsqrt.pop %v1387
    %v1413 = vmul.f32 %v1412, %v1387
    %v1414 = vmul.f32 %v1413, %v1412
    %v1415 = vmul.f32 0.5, %v1414
    %v1416 = vsub.f32 1.5, %v1415
    %v1417 = vmul.f32 %v1412, %v1416
    %vm1418 = vweird.f32 %v1387
    %vm1419 = vweird.f32 %v1412
    %vm1420 = vmor %vm1418, %vm1419
    %v1421 = vsel %vm1420, %v1412, %v1417
    %v1422 = vrsqrt.pop %v1388
    %v1423 = vmul.f32 %v1422, %v1388
    %v1424 = vmul.f32 %v1423, %v1422
    %v1425 = vmul.f32 0.5, %v1424
    %v1426 = vsub.f32 1.5, %v1425
    %v1427 = vmul.f32 %v1422, %v1426
    %vm1428 = vweird.f32 %v1388
    %vm1429 = vweird.f32 %v1422
    %vm1430 = vmor %vm1428, %vm1429
    %v1431 = vsel %vm1430, %v1422, %v1427
    %v1432 = vrsqrt.pop %v1389
    %v1433 = vmul.f32 %v1432, %v1389
    %v1434 = vmul.f32 %v1433, %v1432
    %v1435 = vmul.f32 0.5, %v1434
    %v1436 = vsub.f32 1.5, %v1435
    %v1437 = vmul.f32 %v1432, %v1436
    %vm1438 = vweird.f32 %v1389
    %vm1439 = vweird.f32 %v1432
    %vm1440 = vmor %vm1438, %vm1439
    %v1441 = vsel %vm1440, %v1432, %v1437
    %v1442 = vrsqrt.pop %v1390
    %v1443 = vmul.f32 %v1442, %v1390
    %v1444 = vmul.f32 %v1443, %v1442
    %v1445 = vmul.f32 0.5, %v1444
    %v1446 = vsub.f32 1.5, %v1445
    %v1447 = vmul.f32 %v1442, %v1446
    %vm1448 = vweird.f32 %v1390
    %vm1449 = vweird.f32 %v1442
    %vm1450 = vmor %vm1448, %vm1449
    %v1451 = vsel %vm1450, %v1442, %v1447
    %v1452 = vrsqrt.pop %v1391
    %v1453 = vmul.f32 %v1452, %v1391
    %v1454 = vmul.f32 %v1453, %v1452
    %v1455 = vmul.f32 0.5, %v1454
    %v1456 = vsub.f32 1.5, %v1455
    %v1457 = vmul.f32 %v1452, %v1456
    %vm1458 = vweird.f32 %v1391
    %vm1459 = vweird.f32 %v1452
    %vm1460 = vmor %vm1458, %vm1459
    %v1461 = vsel %vm1460, %v1452, %v1457
    %v1462 = vrsqrt.pop %v1392
    %v1463 = vmul.f32 %v1462, %v1392
    %v1464 = vmul.f32 %v1463, %v1462
    %v1465 = vmul.f32 0.5, %v1464
    %v1466 = vsub.f32 1.5, %v1465
    %v1467 = vmul.f32 %v1462, %v1466
    %vm1468 = vweird.f32 %v1392
    %vm1469 = vweird.f32 %v1462
    %vm1470 = vmor %vm1468, %vm1469
    %v1471 = vsel %vm1470, %v1462, %v1467
    %v1472 = vrsqrt.pop %v1393
    %v1473 = vmul.f32 %v1472, %v1393
    %v1474 = vmul.f32 %v1473, %v1472
    %v1475 = vmul.f32 0.5, %v1474
    %v1476 = vsub.f32 1.5, %v1475
    %v1477 = vmul.f32 %v1472, %v1476
    %vm1478 = vweird.f32 %v1393
    %vm1479 = vweird.f32 %v1472
    %vm1480 = vmor %vm1478, %vm1479
    %v1481 = vsel %vm1480, %v1472, %v1477
    %v1482 = vrsqrt.pop %v1394
    %v1483 = vmul.f32 %v1482, %v1394
    %v1484 = vmul.f32 %v1483, %v1482
    %v1485 = vmul.f32 0.5, %v1484
    %v1486 = vsub.f32 1.5, %v1485
    %v1487 = vmul.f32 %v1482, %v1486
    %vm1488 = vweird.f32 %v1394
    %vm1489 = vweird.f32 %v1482
    %vm1490 = vmor %vm1488, %vm1489
    %v1491 = vsel %vm1490, %v1482, %v1487
    %v1492 = vrsqrt.pop %v1395
    %v1493 = vmul.f32 %v1492, %v1395
    %v1494 = vmul.f32 %v1493, %v1492
    %v1495 = vmul.f32 0.5, %v1494
    %v1496 = vsub.f32 1.5, %v1495
    %v1497 = vmul.f32 %v1492, %v1496
    %vm1498 = vweird.f32 %v1395
    %vm1499 = vweird.f32 %v1492
    %vm1500 = vmor %vm1498, %vm1499
    %v1501 = vsel %vm1500, %v1492, %v1497
    %v1502 = vrsqrt.pop %v1396
    %v1503 = vmul.f32 %v1502, %v1396
    %v1504 = vmul.f32 %v1503, %v1502
    %v1505 = vmul.f32 0.5, %v1504
    %v1506 = vsub.f32 1.5, %v1505
    %v1507 = vmul.f32 %v1502, %v1506
    %vm1508 = vweird.f32 %v1396
    %vm1509 = vweird.f32 %v1502
    %vm1510 = vmor %vm1508, %vm1509
    %v1511 = vsel %vm1510, %v1502, %v1507
    %v1512 = vrsqrt.pop %v1397
    %v1513 = vmul.f32 %v1512, %v1397
    %v1514 = vmul.f32 %v1513, %v1512
    %v1515 = vmul.f32 0.5, %v1514
    %v1516 = vsub.f32 1.5, %v1515
    %v1517 = vmul.f32 %v1512, %v1516
    %vm1518 = vweird.f32 %v1397
    %vm1519 = vweird.f32 %v1512
    %vm1520 = vmor %vm1518, %vm1519
    %v1521 = vsel %vm1520, %v1512, %v1517
    %v1522 = vrsqrt.pop %v1398
    %v1523 = vmul.f32 %v1522, %v1398
    %v1524 = vmul.f32 %v1523, %v1522
    %v1525 = vmul.f32 0.5, %v1524
    %v1526 = vsub.f32 1.5, %v1525
    %v1527 = vmul.f32 %v1522, %v1526
    %vm1528 = vweird.f32 %v1398
    %vm1529 = vweird.f32 %v1522
    %vm1530 = vmor %vm1528, %vm1529
    %v1531 = vsel %vm1530, %v1522, %v1527
    %v1532 = vrsqrt.pop %v1399
    %v1533 = vmul.f32 %v1532, %v1399
    %v1534 = vmul.f32 %v1533, %v1532
    %v1535 = vmul.f32 0.5, %v1534
    %v1536 = vsub.f32 1.5, %v1535
    %v1537 = vmul.f32 %v1532, %v1536
    %vm1538 = vweird.f32 %v1399
    %vm1539 = vweird.f32 %v1532
    %vm1540 = vmor %vm1538, %vm1539
    %v1541 = vsel %vm1540, %v1532, %v1537
    %v1542 = vrsqrt.pop %v1400
    %v1543 = vmul.f32 %v1542, %v1400
    %v1544 = vmul.f32 %v1543, %v1542
    %v1545 = vmul.f32 0.5, %v1544
    %v1546 = vsub.f32 1.5, %v1545
    %v1547 = vmul.f32 %v1542, %v1546
    %vm1548 = vweird.f32 %v1400
    %vm1549 = vweird.f32 %v1542
    %vm1550 = vmor %vm1548, %vm1549
    %v1551 = vsel %vm1550, %v1542, %v1547
    %v1552 = vrsqrt.pop %v1401
    %v1553 = vmul.f32 %v1552, %v1401
    %v1554 = vmul.f32 %v1553, %v1552
    %v1555 = vmul.f32 0.5, %v1554
    %v1556 = vsub.f32 1.5, %v1555
    %v1557 = vmul.f32 %v1552, %v1556
    %vm1558 = vweird.f32 %v1401
    %vm1559 = vweird.f32 %v1552
    %vm1560 = vmor %vm1558, %vm1559
    %v1561 = vsel %vm1560, %v1552, %v1557
    %v1562 = vmul.f32 %v1291, %v1411
    %v1563 = vmul.f32 %v1294, %v1421
    %v1564 = vmul.f32 %v1297, %v1431
    %v1565 = vmul.f32 %v1300, %v1441
    %v1566 = vmul.f32 %v1303, %v1451
    %v1567 = vmul.f32 %v1306, %v1461
    %v1568 = vmul.f32 %v1309, %v1471
    %v1569 = vmul.f32 %v1312, %v1481
    %v1570 = vmul.f32 %v1315, %v1491
    %v1571 = vmul.f32 %v1318, %v1501
    %v1572 = vmul.f32 %v1321, %v1511
    %v1573 = vmul.f32 %v1324, %v1521
    %v1574 = vmul.f32 %v1327, %v1531
    %v1575 = vmul.f32 %v1330, %v1541
    %v1576 = vmul.f32 %v1333, %v1551
    %v1577 = vmul.f32 %v1336, %v1561
    %1578 = vst [vmem:[#allocation10] sm:$0xff] %v1562
    %1579 = vst [vmem:[#allocation10 + $0x8] sm:$0xff] %v1563
    %1580 = vst [vmem:[#allocation10 + $0x10] sm:$0xff] %v1564
    %1581 = vst [vmem:[#allocation10 + $0x18] sm:$0xff] %v1565
    %1582 = vst [vmem:[#allocation10 + $0x20] sm:$0xff] %v1566
    %1583 = vst [vmem:[#allocation10 + $0x28] sm:$0xff] %v1567
    %1584 = vst [vmem:[#allocation10 + $0x30] sm:$0xff] %v1568
    %1585 = vst [vmem:[#allocation10 + $0x38] sm:$0xff] %v1569
    %1586 = vst [vmem:[#allocation10 + $0x40] sm:$0xff] %v1570
    %1587 = vst [vmem:[#allocation10 + $0x48] sm:$0xff] %v1571
    %1588 = vst [vmem:[#allocation10 + $0x50] sm:$0xff] %v1572
    %1589 = vst [vmem:[#allocation10 + $0x58] sm:$0xff] %v1573
    %1590 = vst [vmem:[#allocation10 + $0x60] sm:$0xff] %v1574
    %1591 = vst [vmem:[#allocation10 + $0x68] sm:$0xff] %v1575
    %1592 = vst [vmem:[#allocation10 + $0x70] sm:$0xff] %v1576
    %1593 = vst [vmem:[#allocation10 + $0x78] sm:$0xff] %v1577
    // Predicated region
    $region34: #{tpu_custom_call.1} parent=1 // pred_check
      _
    $region35: #{tpu_custom_call.1} parent=1 // pred_check_branch
      %1595 = sbr.rel (0) target = $region37
    $region36: #{tpu_custom_call.1} parent=1 // pred_region
      %1597 = vsyncadd [#allocation4], 0
      %s1598 = sshll.u32 [#allocation10], 4
      %s1599 = int_to_ptr.vmem [resolvable:$true] %s1598
      %s1600 = sshll.u32 %s4, 4
      %s1601 = int_to_ptr.hbm [resolvable:$true] %s1600
      %1606 = dma.vmem_to_hbm [thread:$0]  %s1599, 2048, %s1601, [#allocation4], 128, 128, 8
    $region37: #{tpu_custom_call.1} parent=1 // pred_fallthru
      _
    // Predicated region
    $region38: #{tpu_custom_call.1} parent=1 // pred_check
      _
    $region39: #{tpu_custom_call.1} parent=1 // pred_check_branch
      %1608 = sbr.rel (0) target = $region41
    $region40: #{tpu_custom_call.1} parent=1 // pred_region
      %1610 = dma.done [#allocation4], 2048
    $region41: #{tpu_custom_call.1} parent=1 // pred_fallthru
      _
    %1611 = vsyncpa [#allocation3], 1
    %1612 = vsyncpa [#allocation6], 1
    %1613 = vsyncpa [#allocation9], 1
    %1614 = vsyncpa [#allocation4], 1

</llo_original>
